<compile_context>
chip_gen: v6e
topology: v6e:2x2x1
jax: 0.10.0
libtpu: 0.0.40
codegen_flags: <defaults>
</compile_context>

<pallas_src>
import functools

import jax
import jax.numpy as jnp
from jax.experimental import pallas as pl
from jax.experimental.pallas import tpu as pltpu

BN_EPS = 1e-5
MXU_DTYPE = jnp.bfloat16   # bf16 MXU path (0/1 one-hots exact); set jnp.float32 for f32 parity


def _round_up(v, m):
    return (v + m - 1) // m * m


def _pad_to(a, tail):
    """Zero-pad the trailing len(tail) dims of `a` up to `tail`."""
    k = a.ndim - len(tail)
    pads = [(0, 0)] * k + [(0, t - s) for s, t in zip(a.shape[k:], tail)]
    return jnp.pad(a, pads)


# --------------------------------------------------------------------------
# Fused encoder kernel: one grid step == one encoder layer
# --------------------------------------------------------------------------
def _encoder_kernel(x_ref, ea_ref, oh_src_ref, oh_dst_ref,
                    wn_n_ref, wn_e_ref, we_both_ref,
                    att_n_ref, att_e_ref, b_n_ref, b_e_ref,
                    gamma_ref, beta_ref,
                    out_ref, h_scr,
                    *, d, negative_slope, n_layer, emit_all):
    layer = pl.program_id(0)
    d_pad = x_ref.shape[-1]

    # Layer 0: initialize the resident hidden state (both branches start at x).
    @pl.when(layer == 0)
    def _init():
        x = x_ref[...]
        h_scr[0] = x
        h_scr[1] = x

    # Lane masks for the zero-padded feature columns (tiny, layer-invariant).
    col = jax.lax.broadcasted_iota(jnp.int32, (1, d_pad), 1)
    keep = (col < d).astype(jnp.float32)    # 1 on real feature columns
    e_d = (col == d).astype(jnp.float32)    # unit vector on the denominator column

    # Fused edge transform for both branches: one (E, de) @ (de, 2*d_pad) dot.
    ew_both = jnp.dot(ea_ref[...], we_both_ref[...].astype(MXU_DTYPE),
                      preferred_element_type=jnp.float32)             # (E, 2*d_pad)
    ew_n = ew_both[:, :d_pad]
    ew_e = ew_both[:, d_pad:]

    def conv(h_in, gather_mx, scatter_mx, wn, ew, att_row, bias):
        # Node transform BEFORE the gather: G @ (h @ Wn) == (G @ h) @ Wn.
        hw = jnp.dot(h_in.astype(MXU_DTYPE), wn.astype(MXU_DTYPE),
                     preferred_element_type=jnp.float32)              # (N, d_pad)
        xn = jnp.dot(gather_mx, hw.astype(MXU_DTYPE),
                     preferred_element_type=jnp.float32)              # (E, d_pad)
        m = xn + ew                                                   # (E, d_pad)

        # Attention logits on VPU/XLU (no width-1 MXU matmul).
        s = jnp.sum(m * att_row, axis=-1, keepdims=True)              # (E, 1)
        s = jnp.where(s > 0, s, negative_slope * s)                   # leaky relu

        # Segment softmax folded into the scatter dot; one global shift
        # cancels in the ratio -> only E exps, no (E,N) masked temporaries.
        w = jnp.exp(s - jnp.max(s, axis=0, keepdims=True))            # (E, 1), <= 1
        wm = w * (m + e_d)                                            # col d carries w_e
        # scatter_mx is (E, N); contract the E axes (TN dims) -> (N, d_pad).
        scat = jax.lax.dot_general(scatter_mx, wm.astype(MXU_DTYPE),
                                   (((0,), (0,)), ((), ())),
                                   preferred_element_type=jnp.float32)
        denom = jnp.sum(scat * e_d, axis=-1, keepdims=True)           # (N, 1)
        inv = pl.reciprocal(jnp.maximum(denom, 1e-30), approx=True)   # EUP
        # Isolated aggregation nodes: numerator row == 0 -> output row == bias.
        return (scat * inv) * keep + bias                             # (N, d_pad)

    # node_nns: flow='target_to_source' -> gather neighbor = dst, aggregate at src.
    # edge_nns: flow='source_to_target' -> gather neighbor = src, aggregate at dst.
    h_i = conv(h_scr[0], oh_dst_ref[...], oh_src_ref[...],
               wn_n_ref[...], ew_n, att_n_ref[...], b_n_ref[...])
    h_j = conv(h_scr[1], oh_src_ref[...], oh_dst_ref[...],
               wn_e_ref[...], ew_e, att_e_ref[...], b_e_ref[...])

    # BatchNorm1d over the concatenation of the two halves (batch statistics),
    # computed from the halves -- no (2N, d) concatenate copy.
    n_rows = 2 * h_i.shape[0]
    mean = (jnp.sum(h_i, axis=0, keepdims=True)
            + jnp.sum(h_j, axis=0, keepdims=True)) / n_rows
    ci = h_i - mean
    cj = h_j - mean
    var = (jnp.sum(ci * ci, axis=0, keepdims=True)
           + jnp.sum(cj * cj, axis=0, keepdims=True)) / n_rows        # biased var
    scale = jax.lax.rsqrt(var + BN_EPS) * gamma_ref[...]
    y_i = ci * scale + beta_ref[...]
    y_j = cj * scale + beta_ref[...]

    # Conditional ReLU (all but the last layer); dropout p = 0.0 -> identity.
    last = layer == n_layer - 1
    y_i = jnp.where(last, y_i, jnp.maximum(y_i, 0.0))
    y_j = jnp.where(last, y_j, jnp.maximum(y_j, 0.0))

    h_scr[0] = y_i                 # carry to next layer (stays in VMEM)
    h_scr[1] = y_j

    if emit_all:                   # JK in {'concat', 'max', 'sum'}: per-layer outputs
        out_ref[0] = y_i
        out_ref[1] = y_j
    else:                          # JK == 'last': single writeback on the final layer
        @pl.when(last)
        def _emit():
            out_ref[0] = y_i
            out_ref[1] = y_j


# --------------------------------------------------------------------------
# Wrapper: whole encoder in one pallas_call
# --------------------------------------------------------------------------
def _const_spec(shape):
    idx = lambda l: (0,) * len(shape)
    try:
        # Constant block index every step -> single buffer is enough.
        return pl.BlockSpec(shape, idx, pipeline_mode=pl.Buffered(buffer_count=1))
    except (TypeError, AttributeError):
        return pl.BlockSpec(shape, idx)   # older API: default double buffering


def _layer_spec(shape):
    return pl.BlockSpec((None,) + shape, lambda l: (l,) + (0,) * len(shape))


def gbn_encoder_forward(params, x, edge_index, edge_attr, *, n_layer,
                        negative_slope, JK="last"):
    N, d = x.shape
    E, de = edge_attr.shape
    # +1 spare lane carries the softmax denominator through the scatter dot.
    d_pad = _round_up(d + 1, 128)
    src, dst = edge_index[0], edge_index[1]

    # Only two one-hot matrices: each is the gather matrix of one branch and
    # the scatter matrix of the other (0/1 values are exact in bf16).
    oh_src = jax.nn.one_hot(src, N, dtype=MXU_DTYPE)   # (E, N)
    oh_dst = jax.nn.one_hot(dst, N, dtype=MXU_DTYPE)   # (E, N)

    x_p = _pad_to(x.astype(jnp.float32), (N, d_pad))
    ea = edge_attr.astype(MXU_DTYPE)

    wn_n = _pad_to(params["Wn_node"], (d_pad, d_pad))
    wn_e = _pad_to(params["Wn_edge"], (d_pad, d_pad))
    we_both = jnp.concatenate([_pad_to(params["We_node"], (de, d_pad)),
                               _pad_to(params["We_edge"], (de, d_pad))], axis=-1)
    att_n = _pad_to(params["att_node"], (1, d_pad))
    att_e = _pad_to(params["att_edge"], (1, d_pad))
    b_n = _pad_to(params["bias_node"], (1, d_pad))
    b_e = _pad_to(params["bias_edge"], (1, d_pad))
    gamma = _pad_to(params["gamma"], (1, d_pad))
    beta = _pad_to(params["beta"], (1, d_pad))

    emit_all = JK != "last"
    if emit_all:
        out_shape = jax.ShapeDtypeStruct((n_layer, 2, N, d_pad), jnp.float32)
        out_spec = pl.BlockSpec((None, 2, N, d_pad), lambda l: (l, 0, 0, 0))
    else:
        out_shape = jax.ShapeDtypeStruct((2, N, d_pad), jnp.float32)
        out_spec = pl.BlockSpec((2, N, d_pad), lambda l: (0, 0, 0))

    # Explicit scoped-VMEM budget: resident buffers + double-buffered weights
    # + live temporaries, with headroom, clamped to physical VMEM.
    r8 = lambda v: _round_up(v, 8)
    item = jnp.dtype(MXU_DTYPE).itemsize
    resident = (2 * _round_up(E, 32) * _round_up(N, 128) * item       # one-hots (1x buffered)
                + r8(N) * d_pad * 4                                   # x
                + r8(E) * _round_up(de, 128) * item                   # edge_attr (lane padded)
                + 2 * r8(N) * d_pad * 4                               # h_scr
                + 2 * 2 * r8(N) * d_pad * 4)                          # output block(s)
    weights = 2 * 4 * (2 * d_pad * d_pad + r8(de) * 2 * d_pad + 6 * d_pad)
    temps = 4 * (5 * r8(E) * d_pad + 4 * r8(N) * d_pad + r8(E) * 2 * d_pad)
    vmem_limit = int(1.4 * (resident + weights + temps)) + (8 << 20)
    try:
        phys = pltpu.get_tpu_info().vmem_capacity_bytes
    except Exception:
        phys = 64 << 20   # v7x per-TensorCore VMEM (smallest current generation)
    vmem_limit = max(32 << 20, min(vmem_limit, int(phys * 0.9)))

    kernel = functools.partial(_encoder_kernel, d=d,
                               negative_slope=negative_slope,
                               n_layer=n_layer, emit_all=emit_all)

    out = pl.pallas_call(
        kernel,
        out_shape=out_shape,
        grid_spec=pltpu.PrefetchScalarGridSpec(
            num_scalar_prefetch=0,
            grid=(n_layer,),
            in_specs=[
                _const_spec((N, d_pad)),        # x
                _const_spec((E, de)),           # edge_attr
                _const_spec((E, N)),            # oh_src
                _const_spec((E, N)),            # oh_dst
                _layer_spec((d_pad, d_pad)),    # Wn_node (stacked per layer)
                _layer_spec((d_pad, d_pad)),    # Wn_edge
                _layer_spec((de, 2 * d_pad)),   # We_node | We_edge (fused)
                _layer_spec((1, d_pad)),        # att_node
                _layer_spec((1, d_pad)),        # att_edge
                _layer_spec((1, d_pad)),        # bias_node
                _layer_spec((1, d_pad)),        # bias_edge
                _layer_spec((1, d_pad)),        # gamma
                _layer_spec((1, d_pad)),        # beta
            ],
            out_specs=out_spec,
            scratch_shapes=[pltpu.VMEM((2, N, d_pad), jnp.float32)],
        ),
        compiler_params=pltpu.CompilerParams(
            dimension_semantics=("arbitrary",),   # layers carry state
            vmem_limit_bytes=vmem_limit),
    )(x_p, ea, oh_src, oh_dst,
      wn_n, wn_e, we_both, att_n, att_e, b_n, b_e, gamma, beta)

    if JK == "last":
        return out[0, :, :d], out[1, :, :d]

    h_i_all = out[:, 0, :, :d]     # (L, N, d)
    h_j_all = out[:, 1, :, :d]
    if JK == "concat":
        return (jnp.transpose(h_i_all, (1, 0, 2)).reshape(N, n_layer * d),
                jnp.transpose(h_j_all, (1, 0, 2)).reshape(N, n_layer * d))
    if JK == "max":
        return jnp.max(h_i_all, axis=0), jnp.max(h_j_all, axis=0)
    if JK == "sum":
        return jnp.sum(h_i_all, axis=0), jnp.sum(h_j_all, axis=0)
    raise ValueError(JK)


# --------------------------------------------------------------------------
# Deterministic parameter construction (stacked per-layer weights)
# --------------------------------------------------------------------------
def init_params(key, n_layer, d_feature, d_edge):
    def one_conv(k):
        k1, k2, k3, k4 = jax.random.split(k, 4)
        Wn = jax.random.normal(k1, (d_feature, d_feature), jnp.float32) / jnp.sqrt(d_feature)
        We = jax.random.normal(k2, (d_edge, d_feature), jnp.float32) / jnp.sqrt(d_edge)
        att = jax.random.normal(k3, (1, d_feature), jnp.float32) / jnp.sqrt(d_feature)
        bias = 0.01 * jax.random.normal(k4, (1, d_feature), jnp.float32)
        return Wn, We, att, bias

    acc = {k: [] for k in ("Wn_node", "We_node", "att_node", "bias_node",
                           "Wn_edge", "We_edge", "att_edge", "bias_edge")}
    for _ in range(n_layer):
        key, kn, ke = jax.random.split(key, 3)
        wn, we, a, b = one_conv(kn)
        acc["Wn_node"].append(wn); acc["We_node"].append(we)
        acc["att_node"].append(a); acc["bias_node"].append(b)
        wn, we, a, b = one_conv(ke)
        acc["Wn_edge"].append(wn); acc["We_edge"].append(we)
        acc["att_edge"].append(a); acc["bias_edge"].append(b)

    params = {k: jnp.stack(v, axis=0) for k, v in acc.items()}
    params["gamma"] = jnp.ones((n_layer, 1, d_feature), jnp.float32)
    params["beta"] = jnp.zeros((n_layer, 1, d_feature), jnp.float32)
    return params


# --------------------------------------------------------------------------
if __name__ == "__main__":
    opt = dict(n_layer=2, feature_dim=32, edge_feature_dim=8, dropout=0.0,
               negative_slope=0.2, bias=True, local=False)
    N, E = 8, 16
    d, de = opt["feature_dim"], opt["edge_feature_dim"]

    key = jax.random.PRNGKey(0)
    kx, ke, ki, kp = jax.random.split(key, 4)
    x = jax.random.normal(kx, (N, d), jnp.float32)
    edge_attr = jax.random.normal(ke, (E, de), jnp.float32)
    edge_index = jax.random.randint(ki, (2, E), 0, N, dtype=jnp.int32)

    params = init_params(kp, opt["n_layer"], d, de)

    fwd = jax.jit(functools.partial(gbn_encoder_forward,
                                    n_layer=opt["n_layer"],
                                    negative_slope=opt["negative_slope"],
                                    JK="last"))
    h_i, h_j = fwd(params, x, edge_index, edge_attr)
    jax.block_until_ready(h_i)
    jax.block_until_ready(h_j)

    assert h_i.shape == (N, d) and h_j.shape == (N, d)
    assert bool(jnp.all(jnp.isfinite(h_i))) and bool(jnp.all(jnp.isfinite(h_j)))
    print("KERNEL_OK")
</pallas_src>

<mosaic_0001>
module attributes {stable_mosaic.version = 11 : i64} {
  func.func @_encoder_kernel(%arg0: i32, %arg1: memref<8x128xf32, #tpu.memory_space<vmem>>, %arg2: memref<16x8xbf16, #tpu.memory_space<vmem>>, %arg3: memref<16x8xbf16, #tpu.memory_space<vmem>>, %arg4: memref<16x8xbf16, #tpu.memory_space<vmem>>, %arg5: memref<1x128x128xf32, #tpu.memory_space<vmem>>, %arg6: memref<1x128x128xf32, #tpu.memory_space<vmem>>, %arg7: memref<1x8x256xf32, #tpu.memory_space<vmem>>, %arg8: memref<1x1x128xf32, #tpu.memory_space<vmem>>, %arg9: memref<1x1x128xf32, #tpu.memory_space<vmem>>, %arg10: memref<1x1x128xf32, #tpu.memory_space<vmem>>, %arg11: memref<1x1x128xf32, #tpu.memory_space<vmem>>, %arg12: memref<1x1x128xf32, #tpu.memory_space<vmem>>, %arg13: memref<1x1x128xf32, #tpu.memory_space<vmem>>, %arg14: memref<2x8x128xf32, #tpu.memory_space<vmem>>, %arg15: memref<2x8x128xf32, #tpu.memory_space<vmem>>) attributes {dimension_semantics = [#tpu.dimension_semantics<arbitrary>], iteration_bounds = array<i64: 2>, scalar_prefetch = 0 : i64, scratch_operands = 1 : i64, tpu.core_type = #tpu.core_type<tc>, window_params = [{pipeline_mode = #tpu.pipeline_mode<synchronous>, transform_indices = @transform_0, window_bounds = array<i64: 8, 128>}, {pipeline_mode = #tpu.pipeline_mode<synchronous>, transform_indices = @transform_1, window_bounds = array<i64: 16, 8>}, {pipeline_mode = #tpu.pipeline_mode<synchronous>, transform_indices = @transform_2, window_bounds = array<i64: 16, 8>}, {pipeline_mode = #tpu.pipeline_mode<synchronous>, transform_indices = @transform_3, window_bounds = array<i64: 16, 8>}, {transform_indices = @transform_4, window_bounds = array<i64: 1, 128, 128>}, {transform_indices = @transform_5, window_bounds = array<i64: 1, 128, 128>}, {transform_indices = @transform_6, window_bounds = array<i64: 1, 8, 256>}, {transform_indices = @transform_7, window_bounds = array<i64: 1, 1, 128>}, {transform_indices = @transform_8, window_bounds = array<i64: 1, 1, 128>}, {transform_indices = @transform_9, window_bounds = array<i64: 1, 1, 128>}, {transform_indices = @transform_10, window_bounds = array<i64: 1, 1, 128>}, {transform_indices = @transform_11, window_bounds = array<i64: 1, 1, 128>}, {transform_indices = @transform_12, window_bounds = array<i64: 1, 1, 128>}, {pipeline_mode = #tpu.pipeline_mode<synchronous>, transform_indices = @transform_13, window_bounds = array<i64: 2, 8, 128>}]} {
    %c0_i32 = arith.constant 0 : i32
    %0 = arith.cmpi eq, %arg0, %c0_i32 : i32
    %1 = arith.extui %0 : i1 to i32
    %c0_i32_0 = arith.constant 0 : i32
    %2 = arith.cmpi ne, %1, %c0_i32_0 : i32
    scf.if %2 {
      %c0_80 = arith.constant 0 : index
      %c0_81 = arith.constant 0 : index
      %170 = vector.load %arg1[%c0_80, %c0_81] : memref<8x128xf32, #tpu.memory_space<vmem>>, vector<8x128xf32>
      %c0_82 = arith.constant 0 : index
      %c0_83 = arith.constant 0 : index
      %c0_84 = arith.constant 0 : index
      %171 = vector.load %arg15[%c0_82, %c0_83, %c0_84] : memref<2x8x128xf32, #tpu.memory_space<vmem>>, vector<1x8x128xf32>
      %172 = vector.shape_cast %171 : vector<1x8x128xf32> to vector<8x128xf32>
      %173 = vector.shape_cast %170 : vector<8x128xf32> to vector<1x8x128xf32>
      tpu.vector_store %arg15[%c0_82, %c0_83, %c0_84], %173 {strides = array<i32>} : memref<2x8x128xf32, #tpu.memory_space<vmem>>, vector<1x8x128xf32>,
      %c1_85 = arith.constant 1 : index
      %c0_86 = arith.constant 0 : index
      %c0_87 = arith.constant 0 : index
      %174 = vector.load %arg15[%c1_85, %c0_86, %c0_87] : memref<2x8x128xf32, #tpu.memory_space<vmem>>, vector<1x8x128xf32>
      %175 = vector.shape_cast %174 : vector<1x8x128xf32> to vector<8x128xf32>
      %176 = vector.shape_cast %170 : vector<8x128xf32> to vector<1x8x128xf32>
      tpu.vector_store %arg15[%c1_85, %c0_86, %c0_87], %176 {strides = array<i32>} : memref<2x8x128xf32, #tpu.memory_space<vmem>>, vector<1x8x128xf32>,
    } else {
    }
    %3 = tpu.iota {dimensions = array<i32: 1>} : vector<1x128xi32>
    %c32_i32 = arith.constant 32 : i32
    %4 = vector.broadcast %c32_i32 : i32 to vector<1x128xi32>
    %5 = arith.cmpi slt, %3, %4 : vector<1x128xi32>
    %6 = arith.extui %5 : vector<1x128xi1> to vector<1x128xi32>
    %7 = arith.sitofp %6 : vector<1x128xi32> to vector<1x128xf32>
    %c32_i32_1 = arith.constant 32 : i32
    %8 = vector.broadcast %c32_i32_1 : i32 to vector<1x128xi32>
    %9 = arith.cmpi eq, %3, %8 : vector<1x128xi32>
    %10 = arith.extui %9 : vector<1x128xi1> to vector<1x128xi32>
    %11 = arith.sitofp %10 : vector<1x128xi32> to vector<1x128xf32>
    %c0 = arith.constant 0 : index
    %c0_2 = arith.constant 0 : index
    %12 = vector.load %arg2[%c0, %c0_2] : memref<16x8xbf16, #tpu.memory_space<vmem>>, vector<16x8xbf16>
    %c0_3 = arith.constant 0 : index
    %c0_4 = arith.constant 0 : index
    %c0_5 = arith.constant 0 : index
    %13 = vector.load %arg7[%c0_3, %c0_4, %c0_5] : memref<1x8x256xf32, #tpu.memory_space<vmem>>, vector<1x8x256xf32>
    %14 = vector.shape_cast %13 : vector<1x8x256xf32> to vector<8x256xf32>
    %15 = arith.truncf %14 : vector<8x256xf32> to vector<8x256xbf16>
    %cst = arith.constant dense<0.000000e+00> : vector<16x256xf32>
    %16 = tpu.matmul %12, %15, %cst {dimension_numbers = #tpu.dot_dimension_numbers<[1], [0], [0], [1], [0, 0, 1, 1], [], []>} : vector<16x8xbf16>, vector<8x256xbf16>, vector<16x256xf32> -> vector<16x256xf32>
    %17 = vector.extract_strided_slice %16 {offsets = [0, 0], sizes = [16, 128], strides = [1, 1]} : vector<16x256xf32> to vector<16x128xf32>
    %18 = vector.extract_strided_slice %16 {offsets = [0, 128], sizes = [16, 128], strides = [1, 1]} : vector<16x256xf32> to vector<16x128xf32>
    %c0_6 = arith.constant 0 : index
    %c0_7 = arith.constant 0 : index
    %c0_8 = arith.constant 0 : index
    %19 = vector.load %arg15[%c0_6, %c0_7, %c0_8] : memref<2x8x128xf32, #tpu.memory_space<vmem>>, vector<1x8x128xf32>
    %20 = vector.shape_cast %19 : vector<1x8x128xf32> to vector<8x128xf32>
    %c0_9 = arith.constant 0 : index
    %c0_10 = arith.constant 0 : index
    %21 = vector.load %arg4[%c0_9, %c0_10] : memref<16x8xbf16, #tpu.memory_space<vmem>>, vector<16x8xbf16>
    %c0_11 = arith.constant 0 : index
    %c0_12 = arith.constant 0 : index
    %22 = vector.load %arg3[%c0_11, %c0_12] : memref<16x8xbf16, #tpu.memory_space<vmem>>, vector<16x8xbf16>
    %c0_13 = arith.constant 0 : index
    %c0_14 = arith.constant 0 : index
    %c0_15 = arith.constant 0 : index
    %23 = vector.load %arg5[%c0_13, %c0_14, %c0_15] : memref<1x128x128xf32, #tpu.memory_space<vmem>>, vector<1x128x128xf32>
    %24 = vector.shape_cast %23 : vector<1x128x128xf32> to vector<128x128xf32>
    %c0_16 = arith.constant 0 : index
    %c0_17 = arith.constant 0 : index
    %c0_18 = arith.constant 0 : index
    %25 = vector.load %arg8[%c0_16, %c0_17, %c0_18] : memref<1x1x128xf32, #tpu.memory_space<vmem>>, vector<1x1x128xf32>
    %26 = vector.shape_cast %25 : vector<1x1x128xf32> to vector<1x128xf32>
    %c0_19 = arith.constant 0 : index
    %c0_20 = arith.constant 0 : index
    %c0_21 = arith.constant 0 : index
    %27 = vector.load %arg10[%c0_19, %c0_20, %c0_21] : memref<1x1x128xf32, #tpu.memory_space<vmem>>, vector<1x1x128xf32>
    %28 = vector.shape_cast %27 : vector<1x1x128xf32> to vector<1x128xf32>
    %29 = arith.truncf %20 : vector<8x128xf32> to vector<8x128xbf16>
    %30 = arith.truncf %24 : vector<128x128xf32> to vector<128x128xbf16>
    %cst_22 = arith.constant dense<0.000000e+00> : vector<8x128xf32>
    %31 = tpu.matmul %29, %30, %cst_22 {dimension_numbers = #tpu.dot_dimension_numbers<[1], [0], [0], [1], [0, 0, 1, 1], [], []>} : vector<8x128xbf16>, vector<128x128xbf16>, vector<8x128xf32> -> vector<8x128xf32>
    %32 = arith.truncf %31 : vector<8x128xf32> to vector<8x128xbf16>
    %cst_23 = arith.constant dense<0.000000e+00> : vector<16x128xf32>
    %33 = tpu.matmul %21, %32, %cst_23 {dimension_numbers = #tpu.dot_dimension_numbers<[1], [0], [0], [1], [0, 0, 1, 1], [], []>} : vector<16x8xbf16>, vector<8x128xbf16>, vector<16x128xf32> -> vector<16x128xf32>
    %34 = arith.addf %33, %17 : vector<16x128xf32>
    %35 = vector.broadcast %26 : vector<1x128xf32> to vector<16x128xf32>
    %36 = arith.mulf %34, %35 : vector<16x128xf32>
    %cst_24 = arith.constant dense<0.000000e+00> : vector<16xf32>
    %37 = vector.multi_reduction <add>, %36, %cst_24 [1] : vector<16x128xf32> to vector<16xf32>
    %38 = vector.shape_cast %37 : vector<16xf32> to vector<16x1xf32>
    %cst_25 = arith.constant 0.000000e+00 : f32
    %39 = vector.broadcast %cst_25 : f32 to vector<16x1xf32>
    %40 = arith.cmpf ogt, %38, %39 : vector<16x1xf32>
    %cst_26 = arith.constant 2.000000e-01 : f32
    %41 = vector.broadcast %cst_26 : f32 to vector<16x1xf32>
    %42 = arith.mulf %41, %38 : vector<16x1xf32>
    %43 = arith.select %40, %38, %42 : vector<16x1xi1>, vector<16x1xf32>
    %cst_27 = arith.constant dense<0xFF800000> : vector<1xf32>
    %44 = vector.multi_reduction <maximumf>, %43, %cst_27 [0] : vector<16x1xf32> to vector<1xf32>
    %45 = vector.shape_cast %44 : vector<1xf32> to vector<1x1xf32>
    %46 = vector.broadcast %45 : vector<1x1xf32> to vector<16x1xf32>
    %47 = arith.subf %43, %46 : vector<16x1xf32>
    %48 = math.exp %47 : vector<16x1xf32>
    %49 = vector.broadcast %11 : vector<1x128xf32> to vector<16x128xf32>
    %50 = arith.addf %34, %49 : vector<16x128xf32>
    %51 = vector.broadcast %48 : vector<16x1xf32> to vector<16x128xf32>
    %52 = arith.mulf %51, %50 : vector<16x128xf32>
    %53 = arith.truncf %52 : vector<16x128xf32> to vector<16x128xbf16>
    %cst_28 = arith.constant dense<0.000000e+00> : vector<8x128xf32>
    %54 = tpu.matmul %22, %53, %cst_28 {dimension_numbers = #tpu.dot_dimension_numbers<[0], [0], [1], [1], [0, 1, 1, 1], [], []>} : vector<16x8xbf16>, vector<16x128xbf16>, vector<8x128xf32> -> vector<8x128xf32>
    %55 = vector.broadcast %11 : vector<1x128xf32> to vector<8x128xf32>
    %56 = arith.mulf %54, %55 : vector<8x128xf32>
    %cst_29 = arith.constant dense<0.000000e+00> : vector<8xf32>
    %57 = vector.multi_reduction <add>, %56, %cst_29 [1] : vector<8x128xf32> to vector<8xf32>
    %58 = vector.shape_cast %57 : vector<8xf32> to vector<8x1xf32>
    %cst_30 = arith.constant 1.000000e-30 : f32
    %59 = vector.broadcast %cst_30 : f32 to vector<8x1xf32>
    %60 = arith.maximumf %58, %59 : vector<8x1xf32>
    %61 = tpu.reciprocal %60 {approx = true} : vector<8x1xf32> -> vector<8x1xf32>
    %62 = vector.broadcast %61 : vector<8x1xf32> to vector<8x128xf32>
    %63 = arith.mulf %54, %62 : vector<8x128xf32>
    %64 = vector.broadcast %7 : vector<1x128xf32> to vector<8x128xf32>
    %65 = arith.mulf %63, %64 : vector<8x128xf32>
    %66 = vector.broadcast %28 : vector<1x128xf32> to vector<8x128xf32>
    %67 = arith.addf %65, %66 : vector<8x128xf32>
    %c1 = arith.constant 1 : index
    %c0_31 = arith.constant 0 : index
    %c0_32 = arith.constant 0 : index
    %68 = vector.load %arg15[%c1, %c0_31, %c0_32] : memref<2x8x128xf32, #tpu.memory_space<vmem>>, vector<1x8x128xf32>
    %69 = vector.shape_cast %68 : vector<1x8x128xf32> to vector<8x128xf32>
    %c0_33 = arith.constant 0 : index
    %c0_34 = arith.constant 0 : index
    %70 = vector.load %arg3[%c0_33, %c0_34] : memref<16x8xbf16, #tpu.memory_space<vmem>>, vector<16x8xbf16>
    %c0_35 = arith.constant 0 : index
    %c0_36 = arith.constant 0 : index
    %71 = vector.load %arg4[%c0_35, %c0_36] : memref<16x8xbf16, #tpu.memory_space<vmem>>, vector<16x8xbf16>
    %c0_37 = arith.constant 0 : index
    %c0_38 = arith.constant 0 : index
    %c0_39 = arith.constant 0 : index
    %72 = vector.load %arg6[%c0_37, %c0_38, %c0_39] : memref<1x128x128xf32, #tpu.memory_space<vmem>>, vector<1x128x128xf32>
    %73 = vector.shape_cast %72 : vector<1x128x128xf32> to vector<128x128xf32>
    %c0_40 = arith.constant 0 : index
    %c0_41 = arith.constant 0 : index
    %c0_42 = arith.constant 0 : index
    %74 = vector.load %arg9[%c0_40, %c0_41, %c0_42] : memref<1x1x128xf32, #tpu.memory_space<vmem>>, vector<1x1x128xf32>
    %75 = vector.shape_cast %74 : vector<1x1x128xf32> to vector<1x128xf32>
    %c0_43 = arith.constant 0 : index
    %c0_44 = arith.constant 0 : index
    %c0_45 = arith.constant 0 : index
    %76 = vector.load %arg11[%c0_43, %c0_44, %c0_45] : memref<1x1x128xf32, #tpu.memory_space<vmem>>, vector<1x1x128xf32>
    %77 = vector.shape_cast %76 : vector<1x1x128xf32> to vector<1x128xf32>
    %78 = arith.truncf %69 : vector<8x128xf32> to vector<8x128xbf16>
    %79 = arith.truncf %73 : vector<128x128xf32> to vector<128x128xbf16>
    %cst_46 = arith.constant dense<0.000000e+00> : vector<8x128xf32>
    %80 = tpu.matmul %78, %79, %cst_46 {dimension_numbers = #tpu.dot_dimension_numbers<[1], [0], [0], [1], [0, 0, 1, 1], [], []>} : vector<8x128xbf16>, vector<128x128xbf16>, vector<8x128xf32> -> vector<8x128xf32>
    %81 = arith.truncf %80 : vector<8x128xf32> to vector<8x128xbf16>
    %cst_47 = arith.constant dense<0.000000e+00> : vector<16x128xf32>
    %82 = tpu.matmul %70, %81, %cst_47 {dimension_numbers = #tpu.dot_dimension_numbers<[1], [0], [0], [1], [0, 0, 1, 1], [], []>} : vector<16x8xbf16>, vector<8x128xbf16>, vector<16x128xf32> -> vector<16x128xf32>
    %83 = arith.addf %82, %18 : vector<16x128xf32>
    %84 = vector.broadcast %75 : vector<1x128xf32> to vector<16x128xf32>
    %85 = arith.mulf %83, %84 : vector<16x128xf32>
    %cst_48 = arith.constant dense<0.000000e+00> : vector<16xf32>
    %86 = vector.multi_reduction <add>, %85, %cst_48 [1] : vector<16x128xf32> to vector<16xf32>
    %87 = vector.shape_cast %86 : vector<16xf32> to vector<16x1xf32>
    %cst_49 = arith.constant 0.000000e+00 : f32
    %88 = vector.broadcast %cst_49 : f32 to vector<16x1xf32>
    %89 = arith.cmpf ogt, %87, %88 : vector<16x1xf32>
    %cst_50 = arith.constant 2.000000e-01 : f32
    %90 = vector.broadcast %cst_50 : f32 to vector<16x1xf32>
    %91 = arith.mulf %90, %87 : vector<16x1xf32>
    %92 = arith.select %89, %87, %91 : vector<16x1xi1>, vector<16x1xf32>
    %cst_51 = arith.constant dense<0xFF800000> : vector<1xf32>
    %93 = vector.multi_reduction <maximumf>, %92, %cst_51 [0] : vector<16x1xf32> to vector<1xf32>
    %94 = vector.shape_cast %93 : vector<1xf32> to vector<1x1xf32>
    %95 = vector.broadcast %94 : vector<1x1xf32> to vector<16x1xf32>
    %96 = arith.subf %92, %95 : vector<16x1xf32>
    %97 = math.exp %96 : vector<16x1xf32>
    %98 = vector.broadcast %11 : vector<1x128xf32> to vector<16x128xf32>
    %99 = arith.addf %83, %98 : vector<16x128xf32>
    %100 = vector.broadcast %97 : vector<16x1xf32> to vector<16x128xf32>
    %101 = arith.mulf %100, %99 : vector<16x128xf32>
    %102 = arith.truncf %101 : vector<16x128xf32> to vector<16x128xbf16>
    %cst_52 = arith.constant dense<0.000000e+00> : vector<8x128xf32>
    %103 = tpu.matmul %71, %102, %cst_52 {dimension_numbers = #tpu.dot_dimension_numbers<[0], [0], [1], [1], [0, 1, 1, 1], [], []>} : vector<16x8xbf16>, vector<16x128xbf16>, vector<8x128xf32> -> vector<8x128xf32>
    %104 = vector.broadcast %11 : vector<1x128xf32> to vector<8x128xf32>
    %105 = arith.mulf %103, %104 : vector<8x128xf32>
    %cst_53 = arith.constant dense<0.000000e+00> : vector<8xf32>
    %106 = vector.multi_reduction <add>, %105, %cst_53 [1] : vector<8x128xf32> to vector<8xf32>
    %107 = vector.shape_cast %106 : vector<8xf32> to vector<8x1xf32>
    %cst_54 = arith.constant 1.000000e-30 : f32
    %108 = vector.broadcast %cst_54 : f32 to vector<8x1xf32>
    %109 = arith.maximumf %107, %108 : vector<8x1xf32>
    %110 = tpu.reciprocal %109 {approx = true} : vector<8x1xf32> -> vector<8x1xf32>
    %111 = vector.broadcast %110 : vector<8x1xf32> to vector<8x128xf32>
    %112 = arith.mulf %103, %111 : vector<8x128xf32>
    %113 = vector.broadcast %7 : vector<1x128xf32> to vector<8x128xf32>
    %114 = arith.mulf %112, %113 : vector<8x128xf32>
    %115 = vector.broadcast %77 : vector<1x128xf32> to vector<8x128xf32>
    %116 = arith.addf %114, %115 : vector<8x128xf32>
    %cst_55 = arith.constant dense<0.000000e+00> : vector<128xf32>
    %117 = vector.multi_reduction <add>, %67, %cst_55 [0] : vector<8x128xf32> to vector<128xf32>
    %118 = vector.shape_cast %117 : vector<128xf32> to vector<1x128xf32>
    %cst_56 = arith.constant dense<0.000000e+00> : vector<128xf32>
    %119 = vector.multi_reduction <add>, %116, %cst_56 [0] : vector<8x128xf32> to vector<128xf32>
    %120 = vector.shape_cast %119 : vector<128xf32> to vector<1x128xf32>
    %121 = arith.addf %118, %120 : vector<1x128xf32>
    %cst_57 = arith.constant 1.600000e+01 : f32
    %122 = vector.broadcast %cst_57 : f32 to vector<1x128xf32>
    %123 = arith.divf %121, %122 : vector<1x128xf32>
    %124 = vector.broadcast %123 : vector<1x128xf32> to vector<8x128xf32>
    %125 = arith.subf %67, %124 : vector<8x128xf32>
    %126 = vector.broadcast %123 : vector<1x128xf32> to vector<8x128xf32>
    %127 = arith.subf %116, %126 : vector<8x128xf32>
    %128 = arith.mulf %125, %125 : vector<8x128xf32>
    %cst_58 = arith.constant dense<0.000000e+00> : vector<128xf32>
    %129 = vector.multi_reduction <add>, %128, %cst_58 [0] : vector<8x128xf32> to vector<128xf32>
    %130 = vector.shape_cast %129 : vector<128xf32> to vector<1x128xf32>
    %131 = arith.mulf %127, %127 : vector<8x128xf32>
    %cst_59 = arith.constant dense<0.000000e+00> : vector<128xf32>
    %132 = vector.multi_reduction <add>, %131, %cst_59 [0] : vector<8x128xf32> to vector<128xf32>
    %133 = vector.shape_cast %132 : vector<128xf32> to vector<1x128xf32>
    %134 = arith.addf %130, %133 : vector<1x128xf32>
    %cst_60 = arith.constant 1.600000e+01 : f32
    %135 = vector.broadcast %cst_60 : f32 to vector<1x128xf32>
    %136 = arith.divf %134, %135 : vector<1x128xf32>
    %cst_61 = arith.constant 9.99999974E-6 : f32
    %137 = vector.broadcast %cst_61 : f32 to vector<1x128xf32>
    %138 = arith.addf %136, %137 : vector<1x128xf32>
    %139 = math.rsqrt %138 : vector<1x128xf32>
    %c0_62 = arith.constant 0 : index
    %c0_63 = arith.constant 0 : index
    %c0_64 = arith.constant 0 : index
    %140 = vector.load %arg12[%c0_62, %c0_63, %c0_64] : memref<1x1x128xf32, #tpu.memory_space<vmem>>, vector<1x1x128xf32>
    %141 = vector.shape_cast %140 : vector<1x1x128xf32> to vector<1x128xf32>
    %142 = arith.mulf %139, %141 : vector<1x128xf32>
    %143 = vector.broadcast %142 : vector<1x128xf32> to vector<8x128xf32>
    %144 = arith.mulf %125, %143 : vector<8x128xf32>
    %c0_65 = arith.constant 0 : index
    %c0_66 = arith.constant 0 : index
    %c0_67 = arith.constant 0 : index
    %145 = vector.load %arg13[%c0_65, %c0_66, %c0_67] : memref<1x1x128xf32, #tpu.memory_space<vmem>>, vector<1x1x128xf32>
    %146 = vector.shape_cast %145 : vector<1x1x128xf32> to vector<1x128xf32>
    %147 = vector.broadcast %146 : vector<1x128xf32> to vector<8x128xf32>
    %148 = arith.addf %144, %147 : vector<8x128xf32>
    %149 = vector.broadcast %142 : vector<1x128xf32> to vector<8x128xf32>
    %150 = arith.mulf %127, %149 : vector<8x128xf32>
    %c0_68 = arith.constant 0 : index
    %c0_69 = arith.constant 0 : index
    %c0_70 = arith.constant 0 : index
    %151 = vector.load %arg13[%c0_68, %c0_69, %c0_70] : memref<1x1x128xf32, #tpu.memory_space<vmem>>, vector<1x1x128xf32>
    %152 = vector.shape_cast %151 : vector<1x1x128xf32> to vector<1x128xf32>
    %153 = vector.broadcast %152 : vector<1x128xf32> to vector<8x128xf32>
    %154 = arith.addf %150, %153 : vector<8x128xf32>
    %c1_i32 = arith.constant 1 : i32
    %155 = arith.cmpi eq, %arg0, %c1_i32 : i32
    %cst_71 = arith.constant 0.000000e+00 : f32
    %156 = vector.broadcast %cst_71 : f32 to vector<8x128xf32>
    %157 = arith.maximumf %148, %156 : vector<8x128xf32>
    %158 = arith.select %155, %148, %157 : vector<8x128xf32>
    %cst_72 = arith.constant 0.000000e+00 : f32
    %159 = vector.broadcast %cst_72 : f32 to vector<8x128xf32>
    %160 = arith.maximumf %154, %159 : vector<8x128xf32>
    %161 = arith.select %155, %154, %160 : vector<8x128xf32>
    %c0_73 = arith.constant 0 : index
    %c0_74 = arith.constant 0 : index
    %c0_75 = arith.constant 0 : index
    %162 = vector.load %arg15[%c0_73, %c0_74, %c0_75] : memref<2x8x128xf32, #tpu.memory_space<vmem>>, vector<1x8x128xf32>
    %163 = vector.shape_cast %162 : vector<1x8x128xf32> to vector<8x128xf32>
    %164 = vector.shape_cast %158 : vector<8x128xf32> to vector<1x8x128xf32>
    tpu.vector_store %arg15[%c0_73, %c0_74, %c0_75], %164 {strides = array<i32>} : memref<2x8x128xf32, #tpu.memory_space<vmem>>, vector<1x8x128xf32>,
    %c1_76 = arith.constant 1 : index
    %c0_77 = arith.constant 0 : index
    %c0_78 = arith.constant 0 : index
    %165 = vector.load %arg15[%c1_76, %c0_77, %c0_78] : memref<2x8x128xf32, #tpu.memory_space<vmem>>, vector<1x8x128xf32>
    %166 = vector.shape_cast %165 : vector<1x8x128xf32> to vector<8x128xf32>
    %167 = vector.shape_cast %161 : vector<8x128xf32> to vector<1x8x128xf32>
    tpu.vector_store %arg15[%c1_76, %c0_77, %c0_78], %167 {strides = array<i32>} : memref<2x8x128xf32, #tpu.memory_space<vmem>>, vector<1x8x128xf32>,
    %168 = arith.extui %155 : i1 to i32
    %c0_i32_79 = arith.constant 0 : i32
    %169 = arith.cmpi ne, %168, %c0_i32_79 : i32
    scf.if %169 {
      %c0_80 = arith.constant 0 : index
      %c0_81 = arith.constant 0 : index
      %c0_82 = arith.constant 0 : index
      %170 = vector.load %arg14[%c0_80, %c0_81, %c0_82] : memref<2x8x128xf32, #tpu.memory_space<vmem>>, vector<1x8x128xf32>
      %171 = vector.shape_cast %170 : vector<1x8x128xf32> to vector<8x128xf32>
      %172 = vector.shape_cast %158 : vector<8x128xf32> to vector<1x8x128xf32>
      tpu.vector_store %arg14[%c0_80, %c0_81, %c0_82], %172 {strides = array<i32>} : memref<2x8x128xf32, #tpu.memory_space<vmem>>, vector<1x8x128xf32>,
      %c1_83 = arith.constant 1 : index
      %c0_84 = arith.constant 0 : index
      %c0_85 = arith.constant 0 : index
      %173 = vector.load %arg14[%c1_83, %c0_84, %c0_85] : memref<2x8x128xf32, #tpu.memory_space<vmem>>, vector<1x8x128xf32>
      %174 = vector.shape_cast %173 : vector<1x8x128xf32> to vector<8x128xf32>
      %175 = vector.shape_cast %161 : vector<8x128xf32> to vector<1x8x128xf32>
      tpu.vector_store %arg14[%c1_83, %c0_84, %c0_85], %175 {strides = array<i32>} : memref<2x8x128xf32, #tpu.memory_space<vmem>>, vector<1x8x128xf32>,
    } else {
    }
    return
  }
  func.func @transform_0(%arg0: i32) -> (i32, i32) {
    %c0_i32 = arith.constant 0 : i32
    %c0_i32_0 = arith.constant 0 : i32
    %c0_i32_1 = arith.constant 0 : i32
    return %c0_i32, %c0_i32_0 : i32, i32
  }
  func.func @transform_1(%arg0: i32) -> (i32, i32) {
    %c0_i32 = arith.constant 0 : i32
    %c0_i32_0 = arith.constant 0 : i32
    %c0_i32_1 = arith.constant 0 : i32
    return %c0_i32, %c0_i32_0 : i32, i32
  }
  func.func @transform_2(%arg0: i32) -> (i32, i32) {
    %c0_i32 = arith.constant 0 : i32
    %c0_i32_0 = arith.constant 0 : i32
    %c0_i32_1 = arith.constant 0 : i32
    return %c0_i32, %c0_i32_0 : i32, i32
  }
  func.func @transform_3(%arg0: i32) -> (i32, i32) {
    %c0_i32 = arith.constant 0 : i32
    %c0_i32_0 = arith.constant 0 : i32
    %c0_i32_1 = arith.constant 0 : i32
    return %c0_i32, %c0_i32_0 : i32, i32
  }
  func.func @transform_4(%arg0: i32) -> (i32, i32, i32) {
    %c0_i32 = arith.constant 0 : i32
    %c0_i32_0 = arith.constant 0 : i32
    %c0_i32_1 = arith.constant 0 : i32
    return %arg0, %c0_i32, %c0_i32_0 : i32, i32, i32
  }
  func.func @transform_5(%arg0: i32) -> (i32, i32, i32) {
    %c0_i32 = arith.constant 0 : i32
    %c0_i32_0 = arith.constant 0 : i32
    %c0_i32_1 = arith.constant 0 : i32
    return %arg0, %c0_i32, %c0_i32_0 : i32, i32, i32
  }
  func.func @transform_6(%arg0: i32) -> (i32, i32, i32) {
    %c0_i32 = arith.constant 0 : i32
    %c0_i32_0 = arith.constant 0 : i32
    %c0_i32_1 = arith.constant 0 : i32
    return %arg0, %c0_i32, %c0_i32_0 : i32, i32, i32
  }
  func.func @transform_7(%arg0: i32) -> (i32, i32, i32) {
    %c0_i32 = arith.constant 0 : i32
    %c0_i32_0 = arith.constant 0 : i32
    %c0_i32_1 = arith.constant 0 : i32
    return %arg0, %c0_i32, %c0_i32_0 : i32, i32, i32
  }
  func.func @transform_8(%arg0: i32) -> (i32, i32, i32) {
    %c0_i32 = arith.constant 0 : i32
    %c0_i32_0 = arith.constant 0 : i32
    %c0_i32_1 = arith.constant 0 : i32
    return %arg0, %c0_i32, %c0_i32_0 : i32, i32, i32
  }
  func.func @transform_9(%arg0: i32) -> (i32, i32, i32) {
    %c0_i32 = arith.constant 0 : i32
    %c0_i32_0 = arith.constant 0 : i32
    %c0_i32_1 = arith.constant 0 : i32
    return %arg0, %c0_i32, %c0_i32_0 : i32, i32, i32
  }
  func.func @transform_10(%arg0: i32) -> (i32, i32, i32) {
    %c0_i32 = arith.constant 0 : i32
    %c0_i32_0 = arith.constant 0 : i32
    %c0_i32_1 = arith.constant 0 : i32
    return %arg0, %c0_i32, %c0_i32_0 : i32, i32, i32
  }
  func.func @transform_11(%arg0: i32) -> (i32, i32, i32) {
    %c0_i32 = arith.constant 0 : i32
    %c0_i32_0 = arith.constant 0 : i32
    %c0_i32_1 = arith.constant 0 : i32
    return %arg0, %c0_i32, %c0_i32_0 : i32, i32, i32
  }
  func.func @transform_12(%arg0: i32) -> (i32, i32, i32) {
    %c0_i32 = arith.constant 0 : i32
    %c0_i32_0 = arith.constant 0 : i32
    %c0_i32_1 = arith.constant 0 : i32
    return %arg0, %c0_i32, %c0_i32_0 : i32, i32, i32
  }
  func.func @transform_13(%arg0: i32) -> (i32, i32, i32) {
    %c0_i32 = arith.constant 0 : i32
    %c0_i32_0 = arith.constant 0 : i32
    %c0_i32_1 = arith.constant 0 : i32
    %c0_i32_2 = arith.constant 0 : i32
    return %c0_i32, %c0_i32_0, %c0_i32_1 : i32, i32, i32
  }
}

</mosaic_0001>

<llo_original>
// kernel: gbn_encoder_forward.1
$region0: #{gbn_encoder_forward.1}
  #allocation0 [shape = 'u32[]', space=smem, size = 0x4, offset = 0x4, fixed_abs, tag = 'smem constant byte address 0x4 - core index']
  #allocation1 [shape = 'u32[144,128]{1,0:T(1,128)}', space=vmem, size = 0x12000, scoped, tag = 'internal scratch']
  #allocation2 [shape = 'f32[2,8,128]{2,1,0:T(8,128)}', space=vmem, size = 0x2000, scoped, tag = 'scratch operand']
  %s0 = inlined_call_operand.vmem [shape: f32[8,128], index: 0, kind: input, shape index: {}]
  %s1 = inlined_call_operand.vmem [shape: bf16[16,8], index: 1, kind: input, shape index: {}]
  %s2 = inlined_call_operand.vmem [shape: bf16[16,8], index: 2, kind: input, shape index: {}]
  %s3 = inlined_call_operand.vmem [shape: bf16[16,8], index: 3, kind: input, shape index: {}]
  %s4 = inlined_call_operand.vmem [shape: f32[2,128,128], index: 4, kind: input, shape index: {}]
  %s5 = inlined_call_operand.vmem [shape: f32[2,128,128], index: 5, kind: input, shape index: {}]
  %s6 = inlined_call_operand.vmem [shape: f32[2,8,256], index: 6, kind: input, shape index: {}]
  %s7 = inlined_call_operand.vmem [shape: f32[2,1,128], index: 7, kind: input, shape index: {}]
  %s8 = inlined_call_operand.vmem [shape: f32[2,1,128], index: 8, kind: input, shape index: {}]
  %s9 = inlined_call_operand.vmem [shape: f32[2,1,128], index: 9, kind: input, shape index: {}]
  %s10 = inlined_call_operand.vmem [shape: f32[2,1,128], index: 10, kind: input, shape index: {}]
  %s11 = inlined_call_operand.vmem [shape: f32[2,1,128], index: 11, kind: input, shape index: {}]
  %s12 = inlined_call_operand.vmem [shape: f32[2,1,128], index: 12, kind: input, shape index: {}]
  %s13 = inlined_call_operand.vmem [shape: f32[2,8,128], index: 13, kind: output, shape index: {}]
  %s14 = sld [smem:[#allocation0]]
  $region93: #{gbn_encoder_forward.1} parent=0
    _
  %s16 = ssub.s32 1, %s14
  %s17 = scalar_select 0, %s16, %s14
  loop: start=0, step=1, limit=4
  $region2: #{gbn_encoder_forward.1} parent=0 // loop_pre_header
    _
  $region3: #{gbn_encoder_forward.1} parent=0 // loop_header
    %s19 = sphi 0, %s23
    %p20 = scmp.ge.s32.totalorder %s19, 4
    %s27 = sphi 0, %s27
    %s29 = sphi 0, %s27
    %s30 = sphi 0, %s29
    %s44 = sphi 0, %s30
    %s48 = sphi 0, %s48
    %s50 = sphi 0, %s48
    %s51 = sphi 0, %s50
    %s65 = sphi 0, %s51
    %s69 = sphi 0, %s69
    %s71 = sphi 0, %s69
    %s72 = sphi 0, %s71
    %s86 = sphi 0, %s72
    %s90 = sphi 0, %s90
    %s92 = sphi 0, %s90
    %s93 = sphi 0, %s92
    %s107 = sphi 0, %s93
    %s113 = sphi 0, %s115
    %s116 = sphi 0, %s113
    %s117 = sphi 0, %s116
    %s133 = sphi 0, %s117
    %s139 = sphi 0, %s141
    %s142 = sphi 0, %s139
    %s143 = sphi 0, %s142
    %s159 = sphi 0, %s143
    %s165 = sphi 0, %s167
    %s168 = sphi 0, %s165
    %s169 = sphi 0, %s168
    %s185 = sphi 0, %s169
    %s191 = sphi 0, %s193
    %s194 = sphi 0, %s191
    %s195 = sphi 0, %s194
    %s211 = sphi 0, %s195
    %s217 = sphi 0, %s219
    %s220 = sphi 0, %s217
    %s221 = sphi 0, %s220
    %s237 = sphi 0, %s221
    %s243 = sphi 0, %s245
    %s246 = sphi 0, %s243
    %s247 = sphi 0, %s246
    %s263 = sphi 0, %s247
    %s269 = sphi 0, %s271
    %s272 = sphi 0, %s269
    %s273 = sphi 0, %s272
    %s289 = sphi 0, %s273
    %s295 = sphi 0, %s297
    %s298 = sphi 0, %s295
    %s299 = sphi 0, %s298
    %s315 = sphi 0, %s299
    %s321 = sphi 0, %s323
    %s324 = sphi 0, %s321
    %s325 = sphi 0, %s324
    %s341 = sphi 0, %s325
    %s345 = sphi 0, %s345
    %s347 = sphi 0, %s345
    %s348 = sphi 0, %s347
    %s362 = sphi 0, %s348
  $region4: #{gbn_encoder_forward.1} parent=0 // loop_header_branch
    %22 = sbr.rel (%p20) target = $region8
  $region5: #{gbn_encoder_forward.1} parent=0 // loop_body
    %s24 = ssub.s32 %s19, 1
    %s25 = ssub.s32 %s19, 2
    %s26 = sadd.s32 %s19, 1
    %s28 = sadd.s32 %s27, 1
    %p31 = scmp.eq.s32.totalorder %s19, 1
    %p32 = scmp.ne.s32.totalorder %s27, %s29
    %p33 = scmp.eq.s32.totalorder %s19, 0
    %p34 = por %p32, %p33
    %p35 = scmp.ne.s32.totalorder %s27, %s29
    %p36 = scmp.eq.s32.totalorder %s24, 1
    %p37 = por %p35, %p36
    %p38 = scmp.ne.s32.totalorder %s29, %s30
    %p39 = scmp.eq.s32.totalorder %s24, 0
    %p40 = por %p38, %p39
    %p41 = scmp.ne.s32.totalorder %s29, %s30
    %p42 = scmp.eq.s32.totalorder %s25, 1
    %p43 = por %p41, %p42
    %p45 = scmp.ne.s32.totalorder %s30, %s44
    %p46 = scmp.eq.s32.totalorder %s25, 0
    %p47 = por %p45, %p46
    %s49 = sadd.s32 %s48, 1
    %p52 = scmp.eq.s32.totalorder %s19, 1
    %p53 = scmp.ne.s32.totalorder %s48, %s50
    %p54 = scmp.eq.s32.totalorder %s19, 0
    %p55 = por %p53, %p54
    %p56 = scmp.ne.s32.totalorder %s48, %s50
    %p57 = scmp.eq.s32.totalorder %s24, 1
    %p58 = por %p56, %p57
    %p59 = scmp.ne.s32.totalorder %s50, %s51
    %p60 = scmp.eq.s32.totalorder %s24, 0
    %p61 = por %p59, %p60
    %p62 = scmp.ne.s32.totalorder %s50, %s51
    %p63 = scmp.eq.s32.totalorder %s25, 1
    %p64 = por %p62, %p63
    %p66 = scmp.ne.s32.totalorder %s51, %s65
    %p67 = scmp.eq.s32.totalorder %s25, 0
    %p68 = por %p66, %p67
    %s70 = sadd.s32 %s69, 1
    %p73 = scmp.eq.s32.totalorder %s19, 1
    %p74 = scmp.ne.s32.totalorder %s69, %s71
    %p75 = scmp.eq.s32.totalorder %s19, 0
    %p76 = por %p74, %p75
    %p77 = scmp.ne.s32.totalorder %s69, %s71
    %p78 = scmp.eq.s32.totalorder %s24, 1
    %p79 = por %p77, %p78
    %p80 = scmp.ne.s32.totalorder %s71, %s72
    %p81 = scmp.eq.s32.totalorder %s24, 0
    %p82 = por %p80, %p81
    %p83 = scmp.ne.s32.totalorder %s71, %s72
    %p84 = scmp.eq.s32.totalorder %s25, 1
    %p85 = por %p83, %p84
    %p87 = scmp.ne.s32.totalorder %s72, %s86
    %p88 = scmp.eq.s32.totalorder %s25, 0
    %p89 = por %p87, %p88
    %s91 = sadd.s32 %s90, 1
    %p94 = scmp.eq.s32.totalorder %s19, 1
    %p95 = scmp.ne.s32.totalorder %s90, %s92
    %p96 = scmp.eq.s32.totalorder %s19, 0
    %p97 = por %p95, %p96
    %p98 = scmp.ne.s32.totalorder %s90, %s92
    %p99 = scmp.eq.s32.totalorder %s24, 1
    %p100 = por %p98, %p99
    %p101 = scmp.ne.s32.totalorder %s92, %s93
    %p102 = scmp.eq.s32.totalorder %s24, 0
    %p103 = por %p101, %p102
    %p104 = scmp.ne.s32.totalorder %s92, %s93
    %p105 = scmp.eq.s32.totalorder %s25, 1
    %p106 = por %p104, %p105
    %p108 = scmp.ne.s32.totalorder %s93, %s107
    %p109 = scmp.eq.s32.totalorder %s25, 0
    %p110 = por %p108, %p109
    %s111 = ssub.s32 %s19, %s26
    %p112 = scmp.eq.s32.totalorder %s111, 0
    %s114 = sadd.s32 %s113, 1
    %s115 = scalar_select %p112, %s113, %s114
    %p118 = pneg %p112
    %p119 = scmp.eq.s32.totalorder %s19, 1
    %p120 = por %p118, %p119
    %p121 = scmp.ne.s32.totalorder %s113, %s116
    %p122 = scmp.eq.s32.totalorder %s19, 0
    %p123 = por %p121, %p122
    %p124 = scmp.ne.s32.totalorder %s113, %s116
    %p125 = scmp.eq.s32.totalorder %s24, 1
    %p126 = por %p124, %p125
    %p127 = scmp.ne.s32.totalorder %s116, %s117
    %p128 = scmp.eq.s32.totalorder %s24, 0
    %p129 = por %p127, %p128
    %p130 = scmp.ne.s32.totalorder %s116, %s117
    %p131 = scmp.eq.s32.totalorder %s25, 1
    %p132 = por %p130, %p131
    %p134 = scmp.ne.s32.totalorder %s117, %s133
    %p135 = scmp.eq.s32.totalorder %s25, 0
    %p136 = por %p134, %p135
    %s137 = ssub.s32 %s19, %s26
    %p138 = scmp.eq.s32.totalorder %s137, 0
    %s140 = sadd.s32 %s139, 1
    %s141 = scalar_select %p138, %s139, %s140
    %p144 = pneg %p138
    %p145 = scmp.eq.s32.totalorder %s19, 1
    %p146 = por %p144, %p145
    %p147 = scmp.ne.s32.totalorder %s139, %s142
    %p148 = scmp.eq.s32.totalorder %s19, 0
    %p149 = por %p147, %p148
    %p150 = scmp.ne.s32.totalorder %s139, %s142
    %p151 = scmp.eq.s32.totalorder %s24, 1
    %p152 = por %p150, %p151
    %p153 = scmp.ne.s32.totalorder %s142, %s143
    %p154 = scmp.eq.s32.totalorder %s24, 0
    %p155 = por %p153, %p154
    %p156 = scmp.ne.s32.totalorder %s142, %s143
    %p157 = scmp.eq.s32.totalorder %s25, 1
    %p158 = por %p156, %p157
    %p160 = scmp.ne.s32.totalorder %s143, %s159
    %p161 = scmp.eq.s32.totalorder %s25, 0
    %p162 = por %p160, %p161
    %s163 = ssub.s32 %s19, %s26
    %p164 = scmp.eq.s32.totalorder %s163, 0
    %s166 = sadd.s32 %s165, 1
    %s167 = scalar_select %p164, %s165, %s166
    %p170 = pneg %p164
    %p171 = scmp.eq.s32.totalorder %s19, 1
    %p172 = por %p170, %p171
    %p173 = scmp.ne.s32.totalorder %s165, %s168
    %p174 = scmp.eq.s32.totalorder %s19, 0
    %p175 = por %p173, %p174
    %p176 = scmp.ne.s32.totalorder %s165, %s168
    %p177 = scmp.eq.s32.totalorder %s24, 1
    %p178 = por %p176, %p177
    %p179 = scmp.ne.s32.totalorder %s168, %s169
    %p180 = scmp.eq.s32.totalorder %s24, 0
    %p181 = por %p179, %p180
    %p182 = scmp.ne.s32.totalorder %s168, %s169
    %p183 = scmp.eq.s32.totalorder %s25, 1
    %p184 = por %p182, %p183
    %p186 = scmp.ne.s32.totalorder %s169, %s185
    %p187 = scmp.eq.s32.totalorder %s25, 0
    %p188 = por %p186, %p187
    %s189 = ssub.s32 %s19, %s26
    %p190 = scmp.eq.s32.totalorder %s189, 0
    %s192 = sadd.s32 %s191, 1
    %s193 = scalar_select %p190, %s191, %s192
    %p196 = pneg %p190
    %p197 = scmp.eq.s32.totalorder %s19, 1
    %p198 = por %p196, %p197
    %p199 = scmp.ne.s32.totalorder %s191, %s194
    %p200 = scmp.eq.s32.totalorder %s19, 0
    %p201 = por %p199, %p200
    %p202 = scmp.ne.s32.totalorder %s191, %s194
    %p203 = scmp.eq.s32.totalorder %s24, 1
    %p204 = por %p202, %p203
    %p205 = scmp.ne.s32.totalorder %s194, %s195
    %p206 = scmp.eq.s32.totalorder %s24, 0
    %p207 = por %p205, %p206
    %p208 = scmp.ne.s32.totalorder %s194, %s195
    %p209 = scmp.eq.s32.totalorder %s25, 1
    %p210 = por %p208, %p209
    %p212 = scmp.ne.s32.totalorder %s195, %s211
    %p213 = scmp.eq.s32.totalorder %s25, 0
    %p214 = por %p212, %p213
    %s215 = ssub.s32 %s19, %s26
    %p216 = scmp.eq.s32.totalorder %s215, 0
    %s218 = sadd.s32 %s217, 1
    %s219 = scalar_select %p216, %s217, %s218
    %p222 = pneg %p216
    %p223 = scmp.eq.s32.totalorder %s19, 1
    %p224 = por %p222, %p223
    %p225 = scmp.ne.s32.totalorder %s217, %s220
    %p226 = scmp.eq.s32.totalorder %s19, 0
    %p227 = por %p225, %p226
    %p228 = scmp.ne.s32.totalorder %s217, %s220
    %p229 = scmp.eq.s32.totalorder %s24, 1
    %p230 = por %p228, %p229
    %p231 = scmp.ne.s32.totalorder %s220, %s221
    %p232 = scmp.eq.s32.totalorder %s24, 0
    %p233 = por %p231, %p232
    %p234 = scmp.ne.s32.totalorder %s220, %s221
    %p235 = scmp.eq.s32.totalorder %s25, 1
    %p236 = por %p234, %p235
    %p238 = scmp.ne.s32.totalorder %s221, %s237
    %p239 = scmp.eq.s32.totalorder %s25, 0
    %p240 = por %p238, %p239
    %s241 = ssub.s32 %s19, %s26
    %p242 = scmp.eq.s32.totalorder %s241, 0
    %s244 = sadd.s32 %s243, 1
    %s245 = scalar_select %p242, %s243, %s244
    %p248 = pneg %p242
    %p249 = scmp.eq.s32.totalorder %s19, 1
    %p250 = por %p248, %p249
    %p251 = scmp.ne.s32.totalorder %s243, %s246
    %p252 = scmp.eq.s32.totalorder %s19, 0
    %p253 = por %p251, %p252
    %p254 = scmp.ne.s32.totalorder %s243, %s246
    %p255 = scmp.eq.s32.totalorder %s24, 1
    %p256 = por %p254, %p255
    %p257 = scmp.ne.s32.totalorder %s246, %s247
    %p258 = scmp.eq.s32.totalorder %s24, 0
    %p259 = por %p257, %p258
    %p260 = scmp.ne.s32.totalorder %s246, %s247
    %p261 = scmp.eq.s32.totalorder %s25, 1
    %p262 = por %p260, %p261
    %p264 = scmp.ne.s32.totalorder %s247, %s263
    %p265 = scmp.eq.s32.totalorder %s25, 0
    %p266 = por %p264, %p265
    %s267 = ssub.s32 %s19, %s26
    %p268 = scmp.eq.s32.totalorder %s267, 0
    %s270 = sadd.s32 %s269, 1
    %s271 = scalar_select %p268, %s269, %s270
    %p274 = pneg %p268
    %p275 = scmp.eq.s32.totalorder %s19, 1
    %p276 = por %p274, %p275
    %p277 = scmp.ne.s32.totalorder %s269, %s272
    %p278 = scmp.eq.s32.totalorder %s19, 0
    %p279 = por %p277, %p278
    %p280 = scmp.ne.s32.totalorder %s269, %s272
    %p281 = scmp.eq.s32.totalorder %s24, 1
    %p282 = por %p280, %p281
    %p283 = scmp.ne.s32.totalorder %s272, %s273
    %p284 = scmp.eq.s32.totalorder %s24, 0
    %p285 = por %p283, %p284
    %p286 = scmp.ne.s32.totalorder %s272, %s273
    %p287 = scmp.eq.s32.totalorder %s25, 1
    %p288 = por %p286, %p287
    %p290 = scmp.ne.s32.totalorder %s273, %s289
    %p291 = scmp.eq.s32.totalorder %s25, 0
    %p292 = por %p290, %p291
    %s293 = ssub.s32 %s19, %s26
    %p294 = scmp.eq.s32.totalorder %s293, 0
    %s296 = sadd.s32 %s295, 1
    %s297 = scalar_select %p294, %s295, %s296
    %p300 = pneg %p294
    %p301 = scmp.eq.s32.totalorder %s19, 1
    %p302 = por %p300, %p301
    %p303 = scmp.ne.s32.totalorder %s295, %s298
    %p304 = scmp.eq.s32.totalorder %s19, 0
    %p305 = por %p303, %p304
    %p306 = scmp.ne.s32.totalorder %s295, %s298
    %p307 = scmp.eq.s32.totalorder %s24, 1
    %p308 = por %p306, %p307
    %p309 = scmp.ne.s32.totalorder %s298, %s299
    %p310 = scmp.eq.s32.totalorder %s24, 0
    %p311 = por %p309, %p310
    %p312 = scmp.ne.s32.totalorder %s298, %s299
    %p313 = scmp.eq.s32.totalorder %s25, 1
    %p314 = por %p312, %p313
    %p316 = scmp.ne.s32.totalorder %s299, %s315
    %p317 = scmp.eq.s32.totalorder %s25, 0
    %p318 = por %p316, %p317
    %s319 = ssub.s32 %s19, %s26
    %p320 = scmp.eq.s32.totalorder %s319, 0
    %s322 = sadd.s32 %s321, 1
    %s323 = scalar_select %p320, %s321, %s322
    %p326 = pneg %p320
    %p327 = scmp.eq.s32.totalorder %s19, 1
    %p328 = por %p326, %p327
    %p329 = scmp.ne.s32.totalorder %s321, %s324
    %p330 = scmp.eq.s32.totalorder %s19, 0
    %p331 = por %p329, %p330
    %p332 = scmp.ne.s32.totalorder %s321, %s324
    %p333 = scmp.eq.s32.totalorder %s24, 1
    %p334 = por %p332, %p333
    %p335 = scmp.ne.s32.totalorder %s324, %s325
    %p336 = scmp.eq.s32.totalorder %s24, 0
    %p337 = por %p335, %p336
    %p338 = scmp.ne.s32.totalorder %s324, %s325
    %p339 = scmp.eq.s32.totalorder %s25, 1
    %p340 = por %p338, %p339
    %p342 = scmp.ne.s32.totalorder %s325, %s341
    %p343 = scmp.eq.s32.totalorder %s25, 0
    %p344 = por %p342, %p343
    %s346 = sadd.s32 %s345, 1
    %p349 = scmp.eq.s32.totalorder %s19, 1
    %p350 = scmp.ne.s32.totalorder %s345, %s347
    %p351 = scmp.eq.s32.totalorder %s19, 0
    %p352 = por %p350, %p351
    %p353 = scmp.ne.s32.totalorder %s345, %s347
    %p354 = scmp.eq.s32.totalorder %s24, 1
    %p355 = por %p353, %p354
    %p356 = scmp.ne.s32.totalorder %s347, %s348
    %p357 = scmp.eq.s32.totalorder %s24, 0
    %p358 = por %p356, %p357
    %p359 = scmp.ne.s32.totalorder %s347, %s348
    %p360 = scmp.eq.s32.totalorder %s25, 1
    %p361 = por %p359, %p360
    %p363 = scmp.ne.s32.totalorder %s348, %s362
    %p364 = scmp.eq.s32.totalorder %s25, 0
    %p365 = por %p363, %p364
    %p366 = scmp.le.s32.totalorder 1, %s19
    %p367 = scmp.lt.s32.totalorder %s19, 3
    %p368 = pnand %p366, %p367
    %p369 = pneg %p368
    // Predicated region
    $region9: #{gbn_encoder_forward.1} parent=5 // pred_check
      _
    $region10: #{gbn_encoder_forward.1} parent=5 // pred_check_branch
      %371 = sbr.rel (%p368) target = $region12
    $region11: #{gbn_encoder_forward.1} parent=5 // pred_region
      %s372 = ssub.s32 %s19, 1
      // Predicated region
      $region13: #{gbn_encoder_forward.1} parent=11 // pred_check
        %p373 = pneg %p40
      $region14: #{gbn_encoder_forward.1} parent=11 // pred_check_branch
        %375 = sbr.rel (%p373) target = $region16
      $region15: #{gbn_encoder_forward.1} parent=11 // pred_region
        _
      $region16: #{gbn_encoder_forward.1} parent=11 // pred_fallthru
        _
      // Predicated region
      $region17: #{gbn_encoder_forward.1} parent=11 // pred_check
        %p376 = pneg %p61
      $region18: #{gbn_encoder_forward.1} parent=11 // pred_check_branch
        %378 = sbr.rel (%p376) target = $region20
      $region19: #{gbn_encoder_forward.1} parent=11 // pred_region
        _
      $region20: #{gbn_encoder_forward.1} parent=11 // pred_fallthru
        _
      // Predicated region
      $region21: #{gbn_encoder_forward.1} parent=11 // pred_check
        %p379 = pneg %p82
      $region22: #{gbn_encoder_forward.1} parent=11 // pred_check_branch
        %381 = sbr.rel (%p379) target = $region24
      $region23: #{gbn_encoder_forward.1} parent=11 // pred_region
        _
      $region24: #{gbn_encoder_forward.1} parent=11 // pred_fallthru
        _
      // Predicated region
      $region25: #{gbn_encoder_forward.1} parent=11 // pred_check
        %p382 = pneg %p103
      $region26: #{gbn_encoder_forward.1} parent=11 // pred_check_branch
        %384 = sbr.rel (%p382) target = $region28
      $region27: #{gbn_encoder_forward.1} parent=11 // pred_region
        _
      $region28: #{gbn_encoder_forward.1} parent=11 // pred_fallthru
        _
    $region12: #{gbn_encoder_forward.1} parent=5 // pred_fallthru
      _
    %p385 = scmp.lt.s32.totalorder %s19, 2
    // Predicated region
    $region29: #{gbn_encoder_forward.1} parent=5 // pred_check
      %p386 = pneg %p385
    $region30: #{gbn_encoder_forward.1} parent=5 // pred_check_branch
      %388 = sbr.rel (%p386) target = $region32
    $region31: #{gbn_encoder_forward.1} parent=5 // pred_region
      // Predicated region
      $region33: #{gbn_encoder_forward.1} parent=31 // pred_check
        %p389 = pneg %p123
      $region34: #{gbn_encoder_forward.1} parent=31 // pred_check_branch
        %391 = sbr.rel (%p389) target = $region36
      $region35: #{gbn_encoder_forward.1} parent=31 // pred_region
        %p392 = scmp.lt.s32.totalorder %s19, 1
        %s393 = scalar_select %p392, %s19, 1
        %s394 = smul.addr %s393, 16
        %s395 = smul.addr %s394, 8
        %s396 = scalar_lea.vmem %s4, %s395
      $region36: #{gbn_encoder_forward.1} parent=31 // pred_fallthru
        _
      // Predicated region
      $region37: #{gbn_encoder_forward.1} parent=31 // pred_check
        %p397 = pneg %p149
      $region38: #{gbn_encoder_forward.1} parent=31 // pred_check_branch
        %399 = sbr.rel (%p397) target = $region40
      $region39: #{gbn_encoder_forward.1} parent=31 // pred_region
        %p400 = scmp.lt.s32.totalorder %s19, 1
        %s401 = scalar_select %p400, %s19, 1
        %s402 = smul.addr %s401, 16
        %s403 = smul.addr %s402, 8
        %s404 = scalar_lea.vmem %s5, %s403
      $region40: #{gbn_encoder_forward.1} parent=31 // pred_fallthru
        _
      // Predicated region
      $region41: #{gbn_encoder_forward.1} parent=31 // pred_check
        %p405 = pneg %p175
      $region42: #{gbn_encoder_forward.1} parent=31 // pred_check_branch
        %407 = sbr.rel (%p405) target = $region44
      $region43: #{gbn_encoder_forward.1} parent=31 // pred_region
        %p408 = scmp.lt.s32.totalorder %s19, 1
        %s409 = scalar_select %p408, %s19, 1
        %s410 = smul.addr %s409, 2
        %s411 = smul.addr %s410, 8
        %s412 = scalar_lea.vmem %s6, %s411
      $region44: #{gbn_encoder_forward.1} parent=31 // pred_fallthru
        _
      // Predicated region
      $region45: #{gbn_encoder_forward.1} parent=31 // pred_check
        %p413 = pneg %p201
      $region46: #{gbn_encoder_forward.1} parent=31 // pred_check_branch
        %415 = sbr.rel (%p413) target = $region48
      $region47: #{gbn_encoder_forward.1} parent=31 // pred_region
        %p416 = scmp.lt.s32.totalorder %s19, 1
        %s417 = scalar_select %p416, %s19, 1
        %s418 = scalar_lea.vmem %s7, %s417
      $region48: #{gbn_encoder_forward.1} parent=31 // pred_fallthru
        _
      // Predicated region
      $region49: #{gbn_encoder_forward.1} parent=31 // pred_check
        %p419 = pneg %p227
      $region50: #{gbn_encoder_forward.1} parent=31 // pred_check_branch
        %421 = sbr.rel (%p419) target = $region52
      $region51: #{gbn_encoder_forward.1} parent=31 // pred_region
        %p422 = scmp.lt.s32.totalorder %s19, 1
        %s423 = scalar_select %p422, %s19, 1
        %s424 = scalar_lea.vmem %s8, %s423
      $region52: #{gbn_encoder_forward.1} parent=31 // pred_fallthru
        _
      // Predicated region
      $region53: #{gbn_encoder_forward.1} parent=31 // pred_check
        %p425 = pneg %p253
      $region54: #{gbn_encoder_forward.1} parent=31 // pred_check_branch
        %427 = sbr.rel (%p425) target = $region56
      $region55: #{gbn_encoder_forward.1} parent=31 // pred_region
        %p428 = scmp.lt.s32.totalorder %s19, 1
        %s429 = scalar_select %p428, %s19, 1
        %s430 = scalar_lea.vmem %s9, %s429
      $region56: #{gbn_encoder_forward.1} parent=31 // pred_fallthru
        _
      // Predicated region
      $region57: #{gbn_encoder_forward.1} parent=31 // pred_check
        %p431 = pneg %p279
      $region58: #{gbn_encoder_forward.1} parent=31 // pred_check_branch
        %433 = sbr.rel (%p431) target = $region60
      $region59: #{gbn_encoder_forward.1} parent=31 // pred_region
        %p434 = scmp.lt.s32.totalorder %s19, 1
        %s435 = scalar_select %p434, %s19, 1
        %s436 = scalar_lea.vmem %s10, %s435
      $region60: #{gbn_encoder_forward.1} parent=31 // pred_fallthru
        _
      // Predicated region
      $region61: #{gbn_encoder_forward.1} parent=31 // pred_check
        %p437 = pneg %p305
      $region62: #{gbn_encoder_forward.1} parent=31 // pred_check_branch
        %439 = sbr.rel (%p437) target = $region64
      $region63: #{gbn_encoder_forward.1} parent=31 // pred_region
        %p440 = scmp.lt.s32.totalorder %s19, 1
        %s441 = scalar_select %p440, %s19, 1
        %s442 = scalar_lea.vmem %s11, %s441
      $region64: #{gbn_encoder_forward.1} parent=31 // pred_fallthru
        _
      // Predicated region
      $region65: #{gbn_encoder_forward.1} parent=31 // pred_check
        %p443 = pneg %p331
      $region66: #{gbn_encoder_forward.1} parent=31 // pred_check_branch
        %445 = sbr.rel (%p443) target = $region68
      $region67: #{gbn_encoder_forward.1} parent=31 // pred_region
        %p446 = scmp.lt.s32.totalorder %s19, 1
        %s447 = scalar_select %p446, %s19, 1
        %s448 = scalar_lea.vmem %s12, %s447
      $region68: #{gbn_encoder_forward.1} parent=31 // pred_fallthru
        _
    $region32: #{gbn_encoder_forward.1} parent=5 // pred_fallthru
      _
    %p449 = scmp.le.s32.totalorder 1, %s19
    %p450 = scmp.lt.s32.totalorder %s19, 3
    %p451 = pnand %p449, %p450
    %p452 = pneg %p451
    // Predicated region
    $region69: #{gbn_encoder_forward.1} parent=5 // pred_check
      _
    $region70: #{gbn_encoder_forward.1} parent=5 // pred_check_branch
      %454 = sbr.rel (%p451) target = $region72
    $region71: #{gbn_encoder_forward.1} parent=5 // pred_region
      %s455 = ssub.s32 %s19, 1
      %p456 = pneg %p40
      %p457 = pneg %p37
      %p458 = pneg %p61
      %p459 = pneg %p58
      %p460 = pneg %p82
      %p461 = pneg %p79
      %p462 = pneg %p103
      %p463 = pneg %p100
      %p464 = scmp.lt.s32.totalorder %s24, 1
      %s465 = scalar_select %p464, %s24, 1
      %s466 = smul.addr %s465, 16
      %s467 = smul.addr %s466, 8
      %s468 = scalar_lea.vmem %s4, %s467
      %p469 = pneg %p129
      %p470 = pneg %p126
      %p471 = scmp.lt.s32.totalorder %s24, 1
      %s472 = scalar_select %p471, %s24, 1
      %s473 = smul.addr %s472, 16
      %s474 = smul.addr %s473, 8
      %s475 = scalar_lea.vmem %s5, %s474
      %p476 = pneg %p155
      %p477 = pneg %p152
      %p478 = scmp.lt.s32.totalorder %s24, 1
      %s479 = scalar_select %p478, %s24, 1
      %s480 = smul.addr %s479, 2
      %s481 = smul.addr %s480, 8
      %s482 = scalar_lea.vmem %s6, %s481
      %p483 = pneg %p181
      %p484 = pneg %p178
      %p485 = scmp.lt.s32.totalorder %s24, 1
      %s486 = scalar_select %p485, %s24, 1
      %s487 = scalar_lea.vmem %s7, %s486
      %p488 = pneg %p207
      %p489 = pneg %p204
      %p490 = scmp.lt.s32.totalorder %s24, 1
      %s491 = scalar_select %p490, %s24, 1
      %s492 = scalar_lea.vmem %s8, %s491
      %p493 = pneg %p233
      %p494 = pneg %p230
      %p495 = scmp.lt.s32.totalorder %s24, 1
      %s496 = scalar_select %p495, %s24, 1
      %s497 = scalar_lea.vmem %s9, %s496
      %p498 = pneg %p259
      %p499 = pneg %p256
      %p500 = scmp.lt.s32.totalorder %s24, 1
      %s501 = scalar_select %p500, %s24, 1
      %s502 = scalar_lea.vmem %s10, %s501
      %p503 = pneg %p285
      %p504 = pneg %p282
      %p505 = scmp.lt.s32.totalorder %s24, 1
      %s506 = scalar_select %p505, %s24, 1
      %s507 = scalar_lea.vmem %s11, %s506
      %p508 = pneg %p311
      %p509 = pneg %p308
      %p510 = scmp.lt.s32.totalorder %s24, 1
      %s511 = scalar_select %p510, %s24, 1
      %s512 = scalar_lea.vmem %s12, %s511
      %p513 = pneg %p337
      %p514 = pneg %p334
      %p515 = pneg %p358
      %p516 = pneg %p355
      %p517 = scmp.lt.s32.totalorder %s24, 1
      %s518 = scalar_select %p517, %s24, 1
      %s519 = smul.addr %s518, 16
      %s520 = smul.addr %s519, 8
      %s521 = scalar_lea.vmem %s4, %s520
      %p522 = scmp.lt.s32.totalorder %s24, 1
      %s523 = scalar_select %p522, %s24, 1
      %s524 = smul.addr %s523, 16
      %s525 = smul.addr %s524, 8
      %s526 = scalar_lea.vmem %s5, %s525
      %p527 = scmp.lt.s32.totalorder %s24, 1
      %s528 = scalar_select %p527, %s24, 1
      %s529 = smul.addr %s528, 2
      %s530 = smul.addr %s529, 8
      %s531 = scalar_lea.vmem %s6, %s530
      %p532 = scmp.lt.s32.totalorder %s24, 1
      %s533 = scalar_select %p532, %s24, 1
      %s534 = scalar_lea.vmem %s7, %s533
      %p535 = scmp.lt.s32.totalorder %s24, 1
      %s536 = scalar_select %p535, %s24, 1
      %s537 = scalar_lea.vmem %s8, %s536
      %p538 = scmp.lt.s32.totalorder %s24, 1
      %s539 = scalar_select %p538, %s24, 1
      %s540 = scalar_lea.vmem %s9, %s539
      %p541 = scmp.lt.s32.totalorder %s24, 1
      %s542 = scalar_select %p541, %s24, 1
      %s543 = scalar_lea.vmem %s10, %s542
      %p544 = scmp.lt.s32.totalorder %s24, 1
      %s545 = scalar_select %p544, %s24, 1
      %s546 = scalar_lea.vmem %s11, %s545
      %p547 = scmp.lt.s32.totalorder %s24, 1
      %s548 = scalar_select %p547, %s24, 1
      %s549 = scalar_lea.vmem %s12, %s548
      %p551 = scmp.eq.s32.totalorder %s24, 0
      // Predicated region
      $region73: #{gbn_encoder_forward.1} parent=71 // pred_check
        %p552 = pneg %p551
      $region74: #{gbn_encoder_forward.1} parent=71 // pred_check_branch
        %554 = sbr.rel (%p552) target = $region76
      $region75: #{gbn_encoder_forward.1} parent=71 // pred_region
        %v555 = vld [vmem:[%s0] sm:$0xff]
        %556 = vst [vmem:[#allocation2] sm:$0xff] %v555
        %s557 = scalar_lea.vmem [#allocation2], 8
        %558 = vst [vmem:[%s557] sm:$0xff] %v555
      $region76: #{gbn_encoder_forward.1} parent=71 // pred_fallthru
        _
      %v559 = vlaneseq
      %v560 = vand.u32 %v559, 127
      %vm561 = vcmp.lt.s32.totalorder %v560, 32
      %v562 = vsel %vm561, 1, 0
      %v563 = vcvt.s32.f32 %v562
      %vm564 = vcmp.eq.s32.totalorder %v560, 32
      %v565 = vsel %vm564, 1, 0
      %v566 = vcvt.s32.f32 %v565
      %v567 = vld [vmem:[%s1] sm:$0xf]
      %v568 = vld [vmem:[%s1 + $0x4] sm:$0xf]
      %v569 = vld [vmem:[%s531] sm:$0xff]
      %v570 = vld [vmem:[%s531 + $0x8] sm:$0xff]
      %v571 = vpack.c.bf16 %v569, %v569
      %v572 = vpack.c.bf16 %v570, %v570
      %v575 = vunpack.c.l.b16 %v567
      %v576 = vunpack.c.l.b16 %v568
      %v577 = vpack.c.b16 %v576, %v575
      %vm578 = vcmask 64512
      %v580 = vsel %vm578, %v577, 0
      %vm582 = vcmask 1043456
      %v584 = vsel %vm582, %v571, 0
      %v587 = vsel %vm582, %v572, 0
      %589 = vmatprep.subr.bf16.mxu0 0
      %590 = vmatpush1.bf16.msra.mxu0 0
      %591 = vmatprep.subr.bf16.mxu0 0
      %592 = vmatpush1.bf16.msra.mxu0 0
      %593 = vmatprep.subr.bf16.mxu0 0
      %594 = vmatpush1.bf16.msra.mxu0 0
      %595 = vmatprep.subr.bf16.mxu0 0
      %596 = vmatpush1.bf16.msra.mxu0 0
      %597 = vmatprep.subr.bf16.mxu0 0
      %598 = vmatpush1.bf16.msra.mxu0 0
      %599 = vmatprep.subr.bf16.mxu0 0
      %600 = vmatpush1.bf16.msra.mxu0 0
      %601 = vmatprep.subr.bf16.mxu0 0
      %602 = vmatpush1.bf16.msra.mxu0 0
      %603 = vmatprep.subr.bf16.mxu0 %v587
      %604 = vmatpush1.bf16.msra.mxu0 %v584
      %605 = vmatprep.subr.bf16.mxu0 0
      %606 = vmatpush2.bf16.msra.mxu0 0
      %607 = vmatprep.subr.bf16.mxu0 0
      %608 = vmatpush2.bf16.msra.mxu0 0
      %609 = vmatprep.subr.bf16.mxu0 0
      %610 = vmatpush2.bf16.msra.mxu0 0
      %611 = vmatprep.subr.bf16.mxu0 0
      %612 = vmatpush2.bf16.msra.mxu0 0
      %613 = vmatprep.subr.bf16.mxu0 0
      %614 = vmatpush2.bf16.msra.mxu0 0
      %615 = vmatprep.subr.bf16.mxu0 0
      %616 = vmatpush2.bf16.msra.mxu0 0
      %617 = vmatprep.subr.bf16.mxu0 0
      %618 = vmatpush2.bf16.msra.mxu0 0
      %619 = vmatprep.subr.bf16.mxu0 0
      %620 = vmatpush2.bf16.msra.mxu0 0
      %621 = vmatprep.mubr.bf16.mxu0 0
      %622 = vmatmul.mubr.bf16.gmra.mxu0 %v580
      %v623 = vpop.f32.mrf.mxu0
      %v624 = vadd.f32 0.0, %v623
      %v625 = vpop.f32.mrf.mxu0
      %v626 = vadd.f32 0.0, %v625
      %v627 = vpop.f32.mrf.mxu0
      %v628 = vadd.f32 0.0, %v627
      %v629 = vpop.f32.mrf.mxu0
      %v630 = vadd.f32 0.0, %v629
      %631 = vdwg.mxu0
      %v632 = vld [vmem:[#allocation2] sm:$0xff]
      %v633 = vld [vmem:[%s3] sm:$0xf]
      %v634 = vld [vmem:[%s3 + $0x4] sm:$0xf]
      %v635 = vld [vmem:[%s2] sm:$0xf]
      %v636 = vld [vmem:[%s2 + $0x4] sm:$0xf]
      %v637 = vld [vmem:[%s521] sm:$0xff]
      %v638 = vld [vmem:[%s521 + $0x8] sm:$0xff]
      %v639 = vld [vmem:[%s521 + $0x10] sm:$0xff]
      %v640 = vld [vmem:[%s521 + $0x18] sm:$0xff]
      %v641 = vld [vmem:[%s521 + $0x20] sm:$0xff]
      %v642 = vld [vmem:[%s521 + $0x28] sm:$0xff]
      %v643 = vld [vmem:[%s521 + $0x30] sm:$0xff]
      %v644 = vld [vmem:[%s521 + $0x38] sm:$0xff]
      %v645 = vld [vmem:[%s521 + $0x40] sm:$0xff]
      %v646 = vld [vmem:[%s521 + $0x48] sm:$0xff]
      %v647 = vld [vmem:[%s521 + $0x50] sm:$0xff]
      %v648 = vld [vmem:[%s521 + $0x58] sm:$0xff]
      %v649 = vld [vmem:[%s521 + $0x60] sm:$0xff]
      %v650 = vld [vmem:[%s521 + $0x68] sm:$0xff]
      %v651 = vld [vmem:[%s521 + $0x70] sm:$0xff]
      %v652 = vld [vmem:[%s521 + $0x78] sm:$0xff]
      %v653 = vld [vmem:[%s534] sm:$0x1]
      %v654 = vld [vmem:[%s540] sm:$0x1]
      %v655 = vpack.c.bf16 %v632, %v632
      %v656 = vpack.c.bf16 %v638, %v637
      %v657 = vpack.c.bf16 %v640, %v639
      %v658 = vpack.c.bf16 %v642, %v641
      %v659 = vpack.c.bf16 %v644, %v643
      %v660 = vpack.c.bf16 %v646, %v645
      %v661 = vpack.c.bf16 %v648, %v647
      %v662 = vpack.c.bf16 %v650, %v649
      %v663 = vpack.c.bf16 %v652, %v651
      %664 = vmatprep.subr.bf16.mxu0 0
      %665 = vmatpush1.bf16.msra.mxu0 %v663
      %666 = vmatprep.subr.bf16.mxu0 0
      %667 = vmatpush1.bf16.msra.mxu0 %v662
      %668 = vmatprep.subr.bf16.mxu0 0
      %669 = vmatpush1.bf16.msra.mxu0 %v661
      %670 = vmatprep.subr.bf16.mxu0 0
      %671 = vmatpush1.bf16.msra.mxu0 %v660
      %672 = vmatprep.subr.bf16.mxu0 0
      %673 = vmatpush1.bf16.msra.mxu0 %v659
      %674 = vmatprep.subr.bf16.mxu0 0
      %675 = vmatpush1.bf16.msra.mxu0 %v658
      %676 = vmatprep.subr.bf16.mxu0 0
      %677 = vmatpush1.bf16.msra.mxu0 %v657
      %678 = vmatprep.subr.bf16.mxu0 0
      %679 = vmatpush1.bf16.msra.mxu0 %v656
      %680 = vmatprep.subr.bf16.mxu0 0
      %681 = vmatpush2.bf16.msra.mxu0 0
      %682 = vmatprep.subr.bf16.mxu0 0
      %683 = vmatpush2.bf16.msra.mxu0 0
      %684 = vmatprep.subr.bf16.mxu0 0
      %685 = vmatpush2.bf16.msra.mxu0 0
      %686 = vmatprep.subr.bf16.mxu0 0
      %687 = vmatpush2.bf16.msra.mxu0 0
      %688 = vmatprep.subr.bf16.mxu0 0
      %689 = vmatpush2.bf16.msra.mxu0 0
      %690 = vmatprep.subr.bf16.mxu0 0
      %691 = vmatpush2.bf16.msra.mxu0 0
      %692 = vmatprep.subr.bf16.mxu0 0
      %693 = vmatpush2.bf16.msra.mxu0 0
      %694 = vmatprep.subr.bf16.mxu0 0
      %695 = vmatpush2.bf16.msra.mxu0 0
      %696 = vmatprep.mubr.bf16.mxu0 0
      %697 = vmatmul.mubr.bf16.gmra.mxu0 %v655
      %v698 = vpop.f32.mrf.mxu0
      %v699 = vadd.f32 0.0, %v698
      %v700 = vpop.f32.mrf.mxu0
      %v701 = vpop.f32.mrf.mxu0
      %v702 = vpop.f32.mrf.mxu0
      %703 = vdwg.mxu0
      %v704 = vpack.c.bf16 %v699, %v699
      %v707 = vunpack.c.l.b16 %v633
      %v708 = vunpack.c.l.b16 %v634
      %v709 = vpack.c.b16 %v708, %v707
      %v711 = vsel %vm578, %v709, 0
      %v714 = vsel %vm582, %v704, 0
      %716 = vmatprep.subr.bf16.mxu0 0
      %717 = vmatpush1.bf16.msra.mxu0 0
      %718 = vmatprep.subr.bf16.mxu0 0
      %719 = vmatpush1.bf16.msra.mxu0 0
      %720 = vmatprep.subr.bf16.mxu0 0
      %721 = vmatpush1.bf16.msra.mxu0 0
      %722 = vmatprep.subr.bf16.mxu0 0
      %723 = vmatpush1.bf16.msra.mxu0 0
      %724 = vmatprep.subr.bf16.mxu0 0
      %725 = vmatpush1.bf16.msra.mxu0 0
      %726 = vmatprep.subr.bf16.mxu0 0
      %727 = vmatpush1.bf16.msra.mxu0 0
      %728 = vmatprep.subr.bf16.mxu0 0
      %729 = vmatpush1.bf16.msra.mxu0 0
      %730 = vmatprep.subr.bf16.mxu0 0
      %731 = vmatpush1.bf16.msra.mxu0 %v714
      %732 = vmatprep.subr.bf16.mxu0 0
      %733 = vmatpush2.bf16.msra.mxu0 0
      %734 = vmatprep.subr.bf16.mxu0 0
      %735 = vmatpush2.bf16.msra.mxu0 0
      %736 = vmatprep.subr.bf16.mxu0 0
      %737 = vmatpush2.bf16.msra.mxu0 0
      %738 = vmatprep.subr.bf16.mxu0 0
      %739 = vmatpush2.bf16.msra.mxu0 0
      %740 = vmatprep.subr.bf16.mxu0 0
      %741 = vmatpush2.bf16.msra.mxu0 0
      %742 = vmatprep.subr.bf16.mxu0 0
      %743 = vmatpush2.bf16.msra.mxu0 0
      %744 = vmatprep.subr.bf16.mxu0 0
      %745 = vmatpush2.bf16.msra.mxu0 0
      %746 = vmatprep.subr.bf16.mxu0 0
      %747 = vmatpush2.bf16.msra.mxu0 0
      %748 = vmatprep.mubr.bf16.mxu0 0
      %749 = vmatmul.mubr.bf16.gmra.mxu0 %v711
      %v750 = vpop.f32.mrf.mxu0
      %v751 = vadd.f32 %v624, %v750
      %v752 = vpop.f32.mrf.mxu0
      %v753 = vpop.f32.mrf.mxu0
      %v754 = vadd.f32 %v628, %v753
      %v755 = vpop.f32.mrf.mxu0
      %756 = vdwg.mxu0
      %v758 = vlaneseq
      %v759 = vshrl.u32 %v758, 7
      %v760 = vsub.s32 0, %v759
      %v761 = vrot.slane %v653, %v760
      %v763 = vmul.f32 %v751, %v761
      %v764 = vmul.f32 %v754, %v761
      %765 = vadd.xlane.f32.xlu0 %v763
      %v766 = vpop.xlane.xlu0 %765
      %767 = vadd.xlane.f32.xlu0 %v764
      %v768 = vpop.xlane.xlu0 %767
      %vm769 = vcmp.gt.f32.partialorder %v766, 0.0
      %vm770 = vcmp.gt.f32.partialorder %v768, 0.0
      %v771 = vmul.f32 %v766, 0.2
      %v772 = vmul.f32 %v768, 0.2
      %v773 = vsel %vm769, %v766, %v771
      %v774 = vsel %vm770, %v768, %v772
      %v775 = vmax.f32 %v773, %v774
      %v776 = vrot.slane %v775, 4
      %v777 = vmax.f32 %v775, %v776
      %v778 = vrot.slane %v777, 2
      %v779 = vmax.f32 %v777, %v778
      %v780 = vrot.slane %v779, 1
      %v781 = vmax.f32 %v779, %v780
      %v782 = vsub.f32 %v773, %v781
      %v783 = vsub.f32 %v774, %v781
      %v784 = vmul.f32 %v782, 1.442695
      %v785 = vpow.pop %v784
      %v786 = vmul.f32 %v783, 1.442695
      %v787 = vpow.pop %v786
      %v788 = vadd.f32 %v751, %v566
      %v789 = vadd.f32 %v754, %v566
      %v790 = vmul.f32 %v785, %v788
      %v791 = vmul.f32 %v787, %v789
      %v792 = vpack.c.bf16 %v791, %v790
      %v795 = vunpack.c.l.b16 %v635
      %v796 = vunpack.c.l.b16 %v636
      %v797 = vpack.c.b16 %v796, %v795
      %799 = vxpose.xlu0.c.b16.start [1/8] %v797, 128
      %800 = vxpose.xlu0.c.b16.cont [2/8] 0, 128
      %801 = vxpose.xlu0.c.b16.cont [3/8] 0, 128
      %802 = vxpose.xlu0.c.b16.cont [4/8] 0, 128
      %803 = vxpose.xlu0.c.b16.cont [5/8] 0, 128
      %804 = vxpose.xlu0.c.b16.cont [6/8] 0, 128
      %805 = vxpose.xlu0.c.b16.cont [7/8] 0, 128
      %806 = vxpose.xlu0.c.b16.end [8/8] 0, 128
      %v807 = vpop.trf.xlu0
      %v808 = vpop.trf.xlu0
      %v809 = vpop.trf.xlu0
      %v810 = vpop.trf.xlu0
      %v811 = vpop.trf.xlu0
      %v812 = vpop.trf.xlu0
      %v813 = vpop.trf.xlu0
      %v814 = vpop.trf.xlu0
      %vm815 = vcmask 130048
      %v817 = vsel %vm815, %v807, 0
      %819 = vmatprep.subr.bf16.mxu0 0
      %820 = vmatpush1.bf16.msra.mxu0 0
      %821 = vmatprep.subr.bf16.mxu0 0
      %822 = vmatpush1.bf16.msra.mxu0 0
      %823 = vmatprep.subr.bf16.mxu0 0
      %824 = vmatpush1.bf16.msra.mxu0 0
      %825 = vmatprep.subr.bf16.mxu0 0
      %826 = vmatpush1.bf16.msra.mxu0 0
      %827 = vmatprep.subr.bf16.mxu0 0
      %828 = vmatpush1.bf16.msra.mxu0 0
      %829 = vmatprep.subr.bf16.mxu0 0
      %830 = vmatpush1.bf16.msra.mxu0 0
      %831 = vmatprep.subr.bf16.mxu0 0
      %832 = vmatpush1.bf16.msra.mxu0 0
      %833 = vmatprep.subr.bf16.mxu0 0
      %834 = vmatpush1.bf16.msra.mxu0 %v792
      %835 = vmatprep.subr.bf16.mxu0 0
      %836 = vmatpush2.bf16.msra.mxu0 0
      %837 = vmatprep.subr.bf16.mxu0 0
      %838 = vmatpush2.bf16.msra.mxu0 0
      %839 = vmatprep.subr.bf16.mxu0 0
      %840 = vmatpush2.bf16.msra.mxu0 0
      %841 = vmatprep.subr.bf16.mxu0 0
      %842 = vmatpush2.bf16.msra.mxu0 0
      %843 = vmatprep.subr.bf16.mxu0 0
      %844 = vmatpush2.bf16.msra.mxu0 0
      %845 = vmatprep.subr.bf16.mxu0 0
      %846 = vmatpush2.bf16.msra.mxu0 0
      %847 = vmatprep.subr.bf16.mxu0 0
      %848 = vmatpush2.bf16.msra.mxu0 0
      %849 = vmatprep.subr.bf16.mxu0 0
      %850 = vmatpush2.bf16.msra.mxu0 0
      %851 = vmatprep.mubr.bf16.mxu0 0
      %852 = vmatmul.mubr.bf16.gmra.mxu0 %v817
      %v853 = vpop.f32.mrf.mxu0
      %v854 = vadd.f32 0.0, %v853
      %v855 = vpop.f32.mrf.mxu0
      %v856 = vpop.f32.mrf.mxu0
      %v857 = vpop.f32.mrf.mxu0
      %858 = vdwg.mxu0
      %v859 = vmul.f32 %v854, %v566
      %860 = vadd.xlane.f32.xlu0 %v859
      %v861 = vpop.xlane.xlu0 %860
      %v862 = vmax.f32 %v861, 1e-30
      %v863 = vrcp.pop %v862
      %v864 = vmul.f32 %v854, %v863
      %v865 = vmul.f32 %v864, %v563
      %v867 = vlaneseq
      %v868 = vshrl.u32 %v867, 7
      %v869 = vsub.s32 0, %v868
      %v870 = vrot.slane %v654, %v869
      %v872 = vadd.f32 %v865, %v870
      %s873 = scalar_lea.vmem [#allocation2], 8
      %v874 = vld [vmem:[%s873] sm:$0xff]
      %v875 = vld [vmem:[%s526] sm:$0xff]
      %v876 = vld [vmem:[%s526 + $0x8] sm:$0xff]
      %v877 = vld [vmem:[%s526 + $0x10] sm:$0xff]
      %v878 = vld [vmem:[%s526 + $0x18] sm:$0xff]
      %v879 = vld [vmem:[%s526 + $0x20] sm:$0xff]
      %v880 = vld [vmem:[%s526 + $0x28] sm:$0xff]
      %v881 = vld [vmem:[%s526 + $0x30] sm:$0xff]
      %v882 = vld [vmem:[%s526 + $0x38] sm:$0xff]
      %v883 = vld [vmem:[%s526 + $0x40] sm:$0xff]
      %v884 = vld [vmem:[%s526 + $0x48] sm:$0xff]
      %v885 = vld [vmem:[%s526 + $0x50] sm:$0xff]
      %v886 = vld [vmem:[%s526 + $0x58] sm:$0xff]
      %v887 = vld [vmem:[%s526 + $0x60] sm:$0xff]
      %v888 = vld [vmem:[%s526 + $0x68] sm:$0xff]
      %v889 = vld [vmem:[%s526 + $0x70] sm:$0xff]
      %v890 = vld [vmem:[%s526 + $0x78] sm:$0xff]
      %v891 = vld [vmem:[%s537] sm:$0x1]
      %v892 = vld [vmem:[%s543] sm:$0x1]
      %v893 = vpack.c.bf16 %v874, %v874
      %v894 = vpack.c.bf16 %v876, %v875
      %v895 = vpack.c.bf16 %v878, %v877
      %v896 = vpack.c.bf16 %v880, %v879
      %v897 = vpack.c.bf16 %v882, %v881
      %v898 = vpack.c.bf16 %v884, %v883
      %v899 = vpack.c.bf16 %v886, %v885
      %v900 = vpack.c.bf16 %v888, %v887
      %v901 = vpack.c.bf16 %v890, %v889
      %902 = vmatprep.subr.bf16.mxu0 0
      %903 = vmatpush1.bf16.msra.mxu0 %v901
      %904 = vmatprep.subr.bf16.mxu0 0
      %905 = vmatpush1.bf16.msra.mxu0 %v900
      %906 = vmatprep.subr.bf16.mxu0 0
      %907 = vmatpush1.bf16.msra.mxu0 %v899
      %908 = vmatprep.subr.bf16.mxu0 0
      %909 = vmatpush1.bf16.msra.mxu0 %v898
      %910 = vmatprep.subr.bf16.mxu0 0
      %911 = vmatpush1.bf16.msra.mxu0 %v897
      %912 = vmatprep.subr.bf16.mxu0 0
      %913 = vmatpush1.bf16.msra.mxu0 %v896
      %914 = vmatprep.subr.bf16.mxu0 0
      %915 = vmatpush1.bf16.msra.mxu0 %v895
      %916 = vmatprep.subr.bf16.mxu0 0
      %917 = vmatpush1.bf16.msra.mxu0 %v894
      %918 = vmatprep.subr.bf16.mxu0 0
      %919 = vmatpush2.bf16.msra.mxu0 0
      %920 = vmatprep.subr.bf16.mxu0 0
      %921 = vmatpush2.bf16.msra.mxu0 0
      %922 = vmatprep.subr.bf16.mxu0 0
      %923 = vmatpush2.bf16.msra.mxu0 0
      %924 = vmatprep.subr.bf16.mxu0 0
      %925 = vmatpush2.bf16.msra.mxu0 0
      %926 = vmatprep.subr.bf16.mxu0 0
      %927 = vmatpush2.bf16.msra.mxu0 0
      %928 = vmatprep.subr.bf16.mxu0 0
      %929 = vmatpush2.bf16.msra.mxu0 0
      %930 = vmatprep.subr.bf16.mxu0 0
      %931 = vmatpush2.bf16.msra.mxu0 0
      %932 = vmatprep.subr.bf16.mxu0 0
      %933 = vmatpush2.bf16.msra.mxu0 0
      %934 = vmatprep.mubr.bf16.mxu0 0
      %935 = vmatmul.mubr.bf16.gmra.mxu0 %v893
      %v936 = vpop.f32.mrf.mxu0
      %v937 = vadd.f32 0.0, %v936
      %v938 = vpop.f32.mrf.mxu0
      %v939 = vpop.f32.mrf.mxu0
      %v940 = vpop.f32.mrf.mxu0
      %941 = vdwg.mxu0
      %v942 = vpack.c.bf16 %v937, %v937
      %v944 = vsel %vm578, %v797, 0
      %v947 = vsel %vm582, %v942, 0
      %949 = vmatprep.subr.bf16.mxu0 0
      %950 = vmatpush1.bf16.msra.mxu0 0
      %951 = vmatprep.subr.bf16.mxu0 0
      %952 = vmatpush1.bf16.msra.mxu0 0
      %953 = vmatprep.subr.bf16.mxu0 0
      %954 = vmatpush1.bf16.msra.mxu0 0
      %955 = vmatprep.subr.bf16.mxu0 0
      %956 = vmatpush1.bf16.msra.mxu0 0
      %957 = vmatprep.subr.bf16.mxu0 0
      %958 = vmatpush1.bf16.msra.mxu0 0
      %959 = vmatprep.subr.bf16.mxu0 0
      %960 = vmatpush1.bf16.msra.mxu0 0
      %961 = vmatprep.subr.bf16.mxu0 0
      %962 = vmatpush1.bf16.msra.mxu0 0
      %963 = vmatprep.subr.bf16.mxu0 0
      %964 = vmatpush1.bf16.msra.mxu0 %v947
      %965 = vmatprep.subr.bf16.mxu0 0
      %966 = vmatpush2.bf16.msra.mxu0 0
      %967 = vmatprep.subr.bf16.mxu0 0
      %968 = vmatpush2.bf16.msra.mxu0 0
      %969 = vmatprep.subr.bf16.mxu0 0
      %970 = vmatpush2.bf16.msra.mxu0 0
      %971 = vmatprep.subr.bf16.mxu0 0
      %972 = vmatpush2.bf16.msra.mxu0 0
      %973 = vmatprep.subr.bf16.mxu0 0
      %974 = vmatpush2.bf16.msra.mxu0 0
      %975 = vmatprep.subr.bf16.mxu0 0
      %976 = vmatpush2.bf16.msra.mxu0 0
      %977 = vmatprep.subr.bf16.mxu0 0
      %978 = vmatpush2.bf16.msra.mxu0 0
      %979 = vmatprep.subr.bf16.mxu0 0
      %980 = vmatpush2.bf16.msra.mxu0 0
      %981 = vmatprep.mubr.bf16.mxu0 0
      %982 = vmatmul.mubr.bf16.gmra.mxu0 %v944
      %v983 = vpop.f32.mrf.mxu0
      %v984 = vadd.f32 %v626, %v983
      %v985 = vpop.f32.mrf.mxu0
      %v986 = vpop.f32.mrf.mxu0
      %v987 = vadd.f32 %v630, %v986
      %v988 = vpop.f32.mrf.mxu0
      %989 = vdwg.mxu0
      %v991 = vlaneseq
      %v992 = vshrl.u32 %v991, 7
      %v993 = vsub.s32 0, %v992
      %v994 = vrot.slane %v891, %v993
      %v996 = vmul.f32 %v984, %v994
      %v997 = vmul.f32 %v987, %v994
      %998 = vadd.xlane.f32.xlu0 %v996
      %v999 = vpop.xlane.xlu0 %998
      %1000 = vadd.xlane.f32.xlu0 %v997
      %v1001 = vpop.xlane.xlu0 %1000
      %vm1002 = vcmp.gt.f32.partialorder %v999, 0.0
      %vm1003 = vcmp.gt.f32.partialorder %v1001, 0.0
      %v1004 = vmul.f32 %v999, 0.2
      %v1005 = vmul.f32 %v1001, 0.2
      %v1006 = vsel %vm1002, %v999, %v1004
      %v1007 = vsel %vm1003, %v1001, %v1005
      %v1008 = vmax.f32 %v1006, %v1007
      %v1009 = vrot.slane %v1008, 4
      %v1010 = vmax.f32 %v1008, %v1009
      %v1011 = vrot.slane %v1010, 2
      %v1012 = vmax.f32 %v1010, %v1011
      %v1013 = vrot.slane %v1012, 1
      %v1014 = vmax.f32 %v1012, %v1013
      %v1015 = vsub.f32 %v1006, %v1014
      %v1016 = vsub.f32 %v1007, %v1014
      %v1017 = vmul.f32 %v1015, 1.442695
      %v1018 = vpow.pop %v1017
      %v1019 = vmul.f32 %v1016, 1.442695
      %v1020 = vpow.pop %v1019
      %v1021 = vadd.f32 %v984, %v566
      %v1022 = vadd.f32 %v987, %v566
      %v1023 = vmul.f32 %v1018, %v1021
      %v1024 = vmul.f32 %v1020, %v1022
      %v1025 = vpack.c.bf16 %v1024, %v1023
      %1027 = vxpose.xlu0.c.b16.start [1/8] %v709, 128
      %1028 = vxpose.xlu0.c.b16.cont [2/8] 0, 128
      %1029 = vxpose.xlu0.c.b16.cont [3/8] 0, 128
      %1030 = vxpose.xlu0.c.b16.cont [4/8] 0, 128
      %1031 = vxpose.xlu0.c.b16.cont [5/8] 0, 128
      %1032 = vxpose.xlu0.c.b16.cont [6/8] 0, 128
      %1033 = vxpose.xlu0.c.b16.cont [7/8] 0, 128
      %1034 = vxpose.xlu0.c.b16.end [8/8] 0, 128
      %v1035 = vpop.trf.xlu0
      %v1036 = vpop.trf.xlu0
      %v1037 = vpop.trf.xlu0
      %v1038 = vpop.trf.xlu0
      %v1039 = vpop.trf.xlu0
      %v1040 = vpop.trf.xlu0
      %v1041 = vpop.trf.xlu0
      %v1042 = vpop.trf.xlu0
      %v1044 = vsel %vm815, %v1035, 0
      %1046 = vmatprep.subr.bf16.mxu0 0
      %1047 = vmatpush1.bf16.msra.mxu0 0
      %1048 = vmatprep.subr.bf16.mxu0 0
      %1049 = vmatpush1.bf16.msra.mxu0 0
      %1050 = vmatprep.subr.bf16.mxu0 0
      %1051 = vmatpush1.bf16.msra.mxu0 0
      %1052 = vmatprep.subr.bf16.mxu0 0
      %1053 = vmatpush1.bf16.msra.mxu0 0
      %1054 = vmatprep.subr.bf16.mxu0 0
      %1055 = vmatpush1.bf16.msra.mxu0 0
      %1056 = vmatprep.subr.bf16.mxu0 0
      %1057 = vmatpush1.bf16.msra.mxu0 0
      %1058 = vmatprep.subr.bf16.mxu0 0
      %1059 = vmatpush1.bf16.msra.mxu0 0
      %1060 = vmatprep.subr.bf16.mxu0 0
      %1061 = vmatpush1.bf16.msra.mxu0 %v1025
      %1062 = vmatprep.subr.bf16.mxu0 0
      %1063 = vmatpush2.bf16.msra.mxu0 0
      %1064 = vmatprep.subr.bf16.mxu0 0
      %1065 = vmatpush2.bf16.msra.mxu0 0
      %1066 = vmatprep.subr.bf16.mxu0 0
      %1067 = vmatpush2.bf16.msra.mxu0 0
      %1068 = vmatprep.subr.bf16.mxu0 0
      %1069 = vmatpush2.bf16.msra.mxu0 0
      %1070 = vmatprep.subr.bf16.mxu0 0
      %1071 = vmatpush2.bf16.msra.mxu0 0
      %1072 = vmatprep.subr.bf16.mxu0 0
      %1073 = vmatpush2.bf16.msra.mxu0 0
      %1074 = vmatprep.subr.bf16.mxu0 0
      %1075 = vmatpush2.bf16.msra.mxu0 0
      %1076 = vmatprep.subr.bf16.mxu0 0
      %1077 = vmatpush2.bf16.msra.mxu0 0
      %1078 = vmatprep.mubr.bf16.mxu0 0
      %1079 = vmatmul.mubr.bf16.gmra.mxu0 %v1044
      %v1080 = vpop.f32.mrf.mxu0
      %v1081 = vadd.f32 0.0, %v1080
      %v1082 = vpop.f32.mrf.mxu0
      %v1083 = vpop.f32.mrf.mxu0
      %v1084 = vpop.f32.mrf.mxu0
      %1085 = vdwg.mxu0
      %v1086 = vmul.f32 %v1081, %v566
      %1087 = vadd.xlane.f32.xlu0 %v1086
      %v1088 = vpop.xlane.xlu0 %1087
      %v1089 = vmax.f32 %v1088, 1e-30
      %v1090 = vrcp.pop %v1089
      %v1091 = vmul.f32 %v1081, %v1090
      %v1092 = vmul.f32 %v1091, %v563
      %v1094 = vlaneseq
      %v1095 = vshrl.u32 %v1094, 7
      %v1096 = vsub.s32 0, %v1095
      %v1097 = vrot.slane %v892, %v1096
      %v1099 = vadd.f32 %v1092, %v1097
      %v1100 = vrot.slane %v872, 4
      %v1101 = vadd.f32 %v872, %v1100
      %v1102 = vrot.slane %v1101, 2
      %v1103 = vadd.f32 %v1101, %v1102
      %v1104 = vrot.slane %v1103, 1
      %v1105 = vadd.f32 %v1103, %v1104
      %v1106 = vrot.slane %v1099, 4
      %v1107 = vadd.f32 %v1099, %v1106
      %v1108 = vrot.slane %v1107, 2
      %v1109 = vadd.f32 %v1107, %v1108
      %v1110 = vrot.slane %v1109, 1
      %v1111 = vadd.f32 %v1109, %v1110
      %v1112 = vadd.f32 %v1105, %v1111
      %v1113 = vrcp.pop 16.0
      %v1114 = vmul.f32 %v1112, %v1113
      %v1115 = vsub.f32 %v872, %v1114
      %v1116 = vsub.f32 %v1099, %v1114
      %v1117 = vmul.f32 %v1115, %v1115
      %v1118 = vrot.slane %v1117, 4
      %v1119 = vadd.f32 %v1117, %v1118
      %v1120 = vrot.slane %v1119, 2
      %v1121 = vadd.f32 %v1119, %v1120
      %v1122 = vrot.slane %v1121, 1
      %v1123 = vadd.f32 %v1121, %v1122
      %v1124 = vmul.f32 %v1116, %v1116
      %v1125 = vrot.slane %v1124, 4
      %v1126 = vadd.f32 %v1124, %v1125
      %v1127 = vrot.slane %v1126, 2
      %v1128 = vadd.f32 %v1126, %v1127
      %v1129 = vrot.slane %v1128, 1
      %v1130 = vadd.f32 %v1128, %v1129
      %v1131 = vadd.f32 %v1123, %v1130
      %v1132 = vmul.f32 %v1131, %v1113
      %v1133 = vadd.f32 %v1132, 1e-05
      %v1134 = vrsqrt.pop %v1133
      %v1135 = vld [vmem:[%s546] sm:$0x1]
      %v1136 = vmul.f32 %v1134, %v1135
      %v1137 = vlaneseq
      %v1138 = vshrl.u32 %v1137, 7
      %v1139 = vsub.s32 0, %v1138
      %v1140 = vrot.slane %v1136, %v1139
      %v1141 = vmul.f32 %v1115, %v1140
      %v1142 = vld [vmem:[%s549] sm:$0x1]
      %v1144 = vlaneseq
      %v1145 = vshrl.u32 %v1144, 7
      %v1146 = vsub.s32 0, %v1145
      %v1147 = vrot.slane %v1142, %v1146
      %v1149 = vadd.f32 %v1141, %v1147
      %v1150 = vmul.f32 %v1116, %v1140
      %v1151 = vadd.f32 %v1150, %v1147
      %p1152 = scmp.eq.s32.totalorder %s24, 1
      %v1153 = vmax.f32 %v1149, 0.0
      %s1154 = scalar_select %p1152, 1, 0
      %v1155 = vstv %s1154
      %vm1156 = vcmp.eq.s32.totalorder %v1155, 1
      %v1157 = vsel %vm1156, %v1149, %v1153
      %v1158 = vmax.f32 %v1151, 0.0
      %v1159 = vsel %vm1156, %v1151, %v1158
      %1160 = vst [vmem:[#allocation2] sm:$0xff] %v1157
      %1161 = vst [vmem:[%s873] sm:$0xff] %v1159
      // Predicated region
      $region77: #{gbn_encoder_forward.1} parent=71 // pred_check
        %p1162 = pneg %p1152
      $region78: #{gbn_encoder_forward.1} parent=71 // pred_check_branch
        %1164 = sbr.rel (%p1162) target = $region80
      $region79: #{gbn_encoder_forward.1} parent=71 // pred_region
        %1165 = vst [vmem:[%s13] sm:$0xff] %v1157
        %s1166 = scalar_lea.vmem %s13, 8
        %1167 = vst [vmem:[%s1166] sm:$0xff] %v1159
      $region80: #{gbn_encoder_forward.1} parent=71 // pred_fallthru
        _
      // Predicated region
      $region81: #{gbn_encoder_forward.1} parent=71 // pred_check
        %p1168 = pneg %p355
      $region82: #{gbn_encoder_forward.1} parent=71 // pred_check_branch
        %1170 = sbr.rel (%p1168) target = $region84
      $region83: #{gbn_encoder_forward.1} parent=71 // pred_region
        _
      $region84: #{gbn_encoder_forward.1} parent=71 // pred_fallthru
        _
      // Predicated region
      $region85: #{gbn_encoder_forward.1} parent=71 // pred_check
        %p1171 = pneg %p355
      $region86: #{gbn_encoder_forward.1} parent=71 // pred_check_branch
        %1173 = sbr.rel (%p1171) target = $region88
      $region87: #{gbn_encoder_forward.1} parent=71 // pred_region
        _
      $region88: #{gbn_encoder_forward.1} parent=71 // pred_fallthru
        _
    $region72: #{gbn_encoder_forward.1} parent=5 // pred_fallthru
      _
    %p1174 = scmp.le.s32.totalorder 2, %s19
    // Predicated region
    $region89: #{gbn_encoder_forward.1} parent=5 // pred_check
      %p1175 = pneg %p1174
    $region90: #{gbn_encoder_forward.1} parent=5 // pred_check_branch
      %1177 = sbr.rel (%p1175) target = $region92
    $region91: #{gbn_encoder_forward.1} parent=5 // pred_region
      %s1178 = ssub.s32 %s19, 2
    $region92: #{gbn_encoder_forward.1} parent=5 // pred_fallthru
      _
  $region6: #{gbn_encoder_forward.1} parent=0 // loop_footer
    %s23 = sadd.s32 1, %s19
  $region7: #{gbn_encoder_forward.1} parent=0 // loop_footer_branch
    %18 = sbr.rel target = $region3
  $region8: #{gbn_encoder_forward.1} parent=0 // loop_exit
    _

</llo_original>
